<compile_context>
chip_gen: v7x
topology: tpu7x:2x2x1
jax: 0.10.0
libtpu: 0.0.40
codegen_flags: <defaults>
</compile_context>

<pallas_src>
import numpy as np
import jax
import jax.numpy as jnp
from jax.experimental import pallas as pl
from jax.experimental.pallas import tpu as pltpu

# ---- configs (small, consistent with the module) ----
B        = 2    # batch
ENC_IN   = 4    # channels (C)   -> must be >= 3 for the final [:, :, :3] slice
SEQ_LEN  = 8    # input sequence length (L)
D_MODEL  = 32   # hidden width of the MLP mixers
PRED_LEN = 8    # projection output length
E_LAYERS = 2    # number of ResBlocks
DTYPE    = jnp.float32

assert ENC_IN >= 3


# ---------------------------------------------------------------------------
# Packed-weight slab layout (static, computed once at import time)
# ---------------------------------------------------------------------------
def _build_weight_layout():
    """(row_offset, n_rows, n_cols) for every param in one [R, D_MODEL] f32 slab.
    Every param starts on an 8-aligned row so in-kernel static slices are clean."""
    layout = {}
    row = 0

    def add(name, nrows, ncols):
        nonlocal row
        layout[name] = (row, nrows, ncols)
        row += -(-nrows // 8) * 8          # round rows up to a sublane multiple

    for l in range(E_LAYERS):
        add(f"tw1_{l}", D_MODEL, SEQ_LEN)  # temporal Linear(L, D) weight, native [D, L]
        add(f"tb1_{l}", 1, D_MODEL)        # [1, D] lane-major row
        add(f"tw2_{l}", SEQ_LEN, D_MODEL)  # temporal Linear(D, L) weight, native [L, D]
        add(f"tb2_{l}", 1, SEQ_LEN)        # [1, L] row
        add(f"cw1_{l}", D_MODEL, ENC_IN)   # channel Linear(C, D) weight, native [D, C]
        add(f"cb1_{l}", D_MODEL, 1)        # [D, 1] column (adds along sublanes of [B,D,L])
        add(f"cw2_{l}", ENC_IN, D_MODEL)   # channel Linear(D, C) weight, native [C, D]
        add(f"cb2_{l}", ENC_IN, 1)         # [C, 1] column (adds along sublanes of [B,C,L])
    add("pw", PRED_LEN, SEQ_LEN)           # projection Linear(L, P) weight, native [P, L]
    add("pb", 1, PRED_LEN)                 # [1, P] row
    return layout, row


_W_LAYOUT, _W_ROWS = _build_weight_layout()
_W_COLS = D_MODEL                          # widest packed column count


def pack_params(params):
    """One-time host-side (numpy) packing of all weights/biases into a single slab.
    Called once at setup -- nothing here runs in the per-forward path."""
    (tw1, tb1, tw2, tb2, cw1, cb1, cw2, cb2, pw, pb) = [np.asarray(p) for p in params]
    slab = np.zeros((_W_ROWS, _W_COLS), np.float32)

    def put(name, mat):
        r, nr, nc = _W_LAYOUT[name]
        slab[r:r + nr, :nc] = mat

    for l in range(E_LAYERS):
        put(f"tw1_{l}", tw1[l]);            put(f"tb1_{l}", tb1[l][None, :])
        put(f"tw2_{l}", tw2[l]);            put(f"tb2_{l}", tb2[l][None, :])
        put(f"cw1_{l}", cw1[l]);            put(f"cb1_{l}", cb1[l][:, None])
        put(f"cw2_{l}", cw2[l]);            put(f"cb2_{l}", cb2[l][:, None])
    put("pw", pw);                          put("pb", pb[None, :])
    return jnp.asarray(slab)


# ---------------------------------------------------------------------------
# Kernel
# ---------------------------------------------------------------------------
def _w(w_ref, name):
    r, nr, nc = _W_LAYOUT[name]
    return w_ref[r:r + nr, :nc]            # static slice of the VMEM slab


def tsmixer_kernel(x_ref, w_ref, out_ref):
    # x_ref : [B, C, L]   (== x_enc.squeeze(1); the temporal-MLP-friendly layout)
    # w_ref : [_W_ROWS, _W_COLS] packed weight slab
    # out_ref: [B, C, P]  (lane-dense output; wrapper transposes to [B, P, C])
    x = x_ref[...]
    for l in range(E_LAYERS):              # static unroll, E_LAYERS == 2
        # ---- temporal mixing (ResBlock.temporal), in the [B, C, L] layout ----
        tw1 = jnp.broadcast_to(_w(w_ref, f"tw1_{l}"), (B, D_MODEL, SEQ_LEN))
        h = jnp.einsum('bcl,bdl->bcd', x, tw1, preferred_element_type=jnp.float32)
        h = jnp.maximum(h + _w(w_ref, f"tb1_{l}"), 0.0)                       # [B, C, D]
        tw2 = jnp.broadcast_to(_w(w_ref, f"tw2_{l}"), (B, SEQ_LEN, D_MODEL))
        y = jnp.einsum('bcd,bld->bcl', h, tw2, preferred_element_type=jnp.float32)
        x = x + y + _w(w_ref, f"tb2_{l}")                                     # residual

        # ---- channel mixing (ResBlock.channel), hidden kept in [B, D, L] ----
        cw1 = jnp.broadcast_to(_w(w_ref, f"cw1_{l}"), (B, D_MODEL, ENC_IN))
        h2 = jnp.einsum('bdc,bcl->bdl', cw1, x, preferred_element_type=jnp.float32)
        h2 = jnp.maximum(h2 + _w(w_ref, f"cb1_{l}"), 0.0)                     # [B, D, L]
        cw2 = jnp.broadcast_to(_w(w_ref, f"cw2_{l}"), (B, ENC_IN, D_MODEL))
        y2 = jnp.einsum('bcd,bdl->bcl', cw2, h2, preferred_element_type=jnp.float32)
        x = x + y2 + _w(w_ref, f"cb2_{l}")                                    # residual
        # (Dropout layers are identity in eval-mode forward.)

    # ---- projection: Linear(L, P) applied along time, output stored as [B, C, P] ----
    pw = jnp.broadcast_to(_w(w_ref, "pw"), (B, PRED_LEN, SEQ_LEN))
    out = jnp.einsum('bcl,bpl->bcp', x, pw, preferred_element_type=jnp.float32)
    out_ref[...] = (out + _w(w_ref, "pb")).astype(out_ref.dtype)


# ---------------------------------------------------------------------------
# Wrapper
# ---------------------------------------------------------------------------
_FLOPS = 2 * B * (E_LAYERS * 4 * ENC_IN * SEQ_LEN * D_MODEL
                  + ENC_IN * SEQ_LEN * PRED_LEN)
_BYTES = (B * ENC_IN * SEQ_LEN + _W_ROWS * _W_COLS + B * ENC_IN * PRED_LEN) * 4


@jax.jit
def tsmixer_forward(x_enc, w_slab):
    """x_enc: [B, 1, ENC_IN, SEQ_LEN], w_slab: packed weights -> [B, PRED_LEN, 3]."""
    # squeeze(1): x_enc already stores the [B, C, L] layout the kernel wants.
    x = x_enc.reshape(B, ENC_IN, SEQ_LEN).astype(DTYPE)

    out_bcp = pl.pallas_call(
        tsmixer_kernel,
        out_shape=jax.ShapeDtypeStruct((B, ENC_IN, PRED_LEN), DTYPE),
        in_specs=[pl.BlockSpec(memory_space=pltpu.MemorySpace.VMEM),
                  pl.BlockSpec(memory_space=pltpu.MemorySpace.VMEM)],
        out_specs=pl.BlockSpec(memory_space=pltpu.MemorySpace.VMEM),
        cost_estimate=pl.CostEstimate(flops=_FLOPS, transcendentals=0,
                                      bytes_accessed=_BYTES),
    )(x, w_slab)

    # dec_out.permute + [:, -pred_len:, :3] (the time slice is a no-op here).
    out = jnp.transpose(out_bcp, (0, 2, 1))                # [B, P, C]
    return out[:, -PRED_LEN:, :3]


# ---------------------------------------------------------------------------
# Params / reference
# ---------------------------------------------------------------------------
def init_params(key):
    """Deterministic init mimicking PyTorch nn.Linear default (U[-1/sqrt(fan_in), .])."""
    ks = jax.random.split(key, 10)

    def lin(k, out_f, in_f, batch_dims=()):
        bound = 1.0 / jnp.sqrt(in_f)
        kw, kb = jax.random.split(k)
        w = jax.random.uniform(kw, batch_dims + (out_f, in_f), DTYPE, -bound, bound)
        b = jax.random.uniform(kb, batch_dims + (out_f,), DTYPE, -bound, bound)
        return w, b

    tw1, tb1 = lin(ks[0], D_MODEL, SEQ_LEN, (E_LAYERS,))   # temporal Linear(seq_len, d_model)
    tw2, tb2 = lin(ks[1], SEQ_LEN, D_MODEL, (E_LAYERS,))   # temporal Linear(d_model, seq_len)
    cw1, cb1 = lin(ks[2], D_MODEL, ENC_IN, (E_LAYERS,))    # channel Linear(enc_in, d_model)
    cw2, cb2 = lin(ks[3], ENC_IN, D_MODEL, (E_LAYERS,))    # channel Linear(d_model, enc_in)
    pw, pb   = lin(ks[4], PRED_LEN, SEQ_LEN)               # projection Linear(seq_len, pred_len)
    return (tw1, tb1, tw2, tb2, cw1, cb1, cw2, cb2, pw, pb)


def reference_forward(x_enc, params):
    """Pure-JAX reference reproducing the PyTorch forward (dropout = identity)."""
    (tw1, tb1, tw2, tb2, cw1, cb1, cw2, cb2, pw, pb) = params
    x = jnp.transpose(jnp.squeeze(x_enc, axis=1), (0, 2, 1)).astype(DTYPE)  # [B, L, C]
    for l in range(E_LAYERS):
        xt = jnp.swapaxes(x, 1, 2)                                   # [B, C, L]
        h = jax.nn.relu(jnp.einsum('bcl,dl->bcd', xt, tw1[l]) + tb1[l])
        y = jnp.einsum('bcd,ld->bcl', h, tw2[l]) + tb2[l]
        x = x + jnp.swapaxes(y, 1, 2)
        h2 = jax.nn.relu(jnp.einsum('blc,dc->bld', x, cw1[l]) + cb1[l])
        y2 = jnp.einsum('bld,cd->blc', h2, cw2[l]) + cb2[l]
        x = x + y2
    xt = jnp.swapaxes(x, 1, 2)                                        # [B, C, L]
    proj = jnp.einsum('bcl,pl->bcp', xt, pw) + pb                     # [B, C, P]
    out = jnp.swapaxes(proj, 1, 2)                                    # [B, P, C]
    return out[:, -PRED_LEN:, :3]


if __name__ == "__main__":
    key = jax.random.PRNGKey(0)
    k_x, k_p = jax.random.split(key)

    # x_enc: [B, 1, enc_in, seq_len]
    x_enc = jax.random.normal(k_x, (B, 1, ENC_IN, SEQ_LEN), DTYPE)
    params = init_params(k_p)

    # One-time weight packing (hoisted out of the forward path, pure numpy).
    w_slab = pack_params(params)

    out = tsmixer_forward(x_enc, w_slab)
    out = jax.block_until_ready(out)

    ref = reference_forward(x_enc, params)
    assert out.shape == (B, PRED_LEN, 3), out.shape
    assert jnp.allclose(out, ref, atol=1e-5, rtol=1e-5), "mismatch vs reference"

    print("KERNEL_OK")
</pallas_src>

<mosaic_0001>
module attributes {stable_mosaic.version = 11 : i64} {
  func.func @tsmixer_kernel(%arg0: memref<2x4x8xf32, #tpu.memory_space<vmem>>, %arg1: memref<288x32xf32, #tpu.memory_space<vmem>>, %arg2: memref<2x4x8xf32, #tpu.memory_space<vmem>>) attributes {dimension_semantics = [], scalar_prefetch = 0 : i64, scratch_operands = 0 : i64, tpu.core_type = #tpu.core_type<tc>} {
    %c0 = arith.constant 0 : index
    %c0_0 = arith.constant 0 : index
    %c0_1 = arith.constant 0 : index
    %0 = vector.load %arg0[%c0, %c0_0, %c0_1] : memref<2x4x8xf32, #tpu.memory_space<vmem>>, vector<2x4x8xf32>
    %c0_2 = arith.constant 0 : index
    %c0_3 = arith.constant 0 : index
    %1 = vector.load %arg1[%c0_2, %c0_3] : memref<288x32xf32, #tpu.memory_space<vmem>>, vector<32x8xf32>
    %2 = vector.shape_cast %1 : vector<32x8xf32> to vector<1x32x8xf32>
    %3 = vector.broadcast %2 : vector<1x32x8xf32> to vector<2x32x8xf32>
    "tpu.trace_start"() <{level = 10 : i32, message = "bcl,bdl->bcd"}> : () -> ()
    %cst = arith.constant dense<0.000000e+00> : vector<2x4x32xf32>
    %4 = tpu.matmul %0, %3, %cst {dimension_numbers = #tpu.dot_dimension_numbers<[2], [2], [1], [1], [0, 0, 0, 1, 1, 1], [0], [0]>} : vector<2x4x8xf32>, vector<2x32x8xf32>, vector<2x4x32xf32> -> vector<2x4x32xf32>
    "tpu.trace_stop"() : () -> ()
    %c32 = arith.constant 32 : index
    %c0_4 = arith.constant 0 : index
    %5 = vector.load %arg1[%c32, %c0_4] : memref<288x32xf32, #tpu.memory_space<vmem>>, vector<1x32xf32>
    %6 = vector.shape_cast %5 : vector<1x32xf32> to vector<1x1x32xf32>
    %7 = vector.broadcast %6 : vector<1x1x32xf32> to vector<2x4x32xf32>
    %8 = arith.addf %4, %7 : vector<2x4x32xf32>
    %cst_5 = arith.constant 0.000000e+00 : f32
    %9 = vector.broadcast %cst_5 : f32 to vector<2x4x32xf32>
    %10 = arith.maximumf %8, %9 : vector<2x4x32xf32>
    %c40 = arith.constant 40 : index
    %c0_6 = arith.constant 0 : index
    %11 = vector.load %arg1[%c40, %c0_6] : memref<288x32xf32, #tpu.memory_space<vmem>>, vector<8x32xf32>
    %12 = vector.shape_cast %11 : vector<8x32xf32> to vector<1x8x32xf32>
    %13 = vector.broadcast %12 : vector<1x8x32xf32> to vector<2x8x32xf32>
    "tpu.trace_start"() <{level = 10 : i32, message = "bcd,bld->bcl"}> : () -> ()
    %cst_7 = arith.constant dense<0.000000e+00> : vector<2x4x8xf32>
    %14 = tpu.matmul %10, %13, %cst_7 {dimension_numbers = #tpu.dot_dimension_numbers<[2], [2], [1], [1], [0, 0, 0, 1, 1, 1], [0], [0]>} : vector<2x4x32xf32>, vector<2x8x32xf32>, vector<2x4x8xf32> -> vector<2x4x8xf32>
    "tpu.trace_stop"() : () -> ()
    %15 = arith.addf %0, %14 : vector<2x4x8xf32>
    %c48 = arith.constant 48 : index
    %c0_8 = arith.constant 0 : index
    %16 = vector.load %arg1[%c48, %c0_8] : memref<288x32xf32, #tpu.memory_space<vmem>>, vector<1x8xf32>
    %17 = vector.shape_cast %16 : vector<1x8xf32> to vector<1x1x8xf32>
    %18 = vector.broadcast %17 : vector<1x1x8xf32> to vector<2x4x8xf32>
    %19 = arith.addf %15, %18 : vector<2x4x8xf32>
    %c56 = arith.constant 56 : index
    %c0_9 = arith.constant 0 : index
    %20 = vector.load %arg1[%c56, %c0_9] : memref<288x32xf32, #tpu.memory_space<vmem>>, vector<32x4xf32>
    %21 = vector.shape_cast %20 : vector<32x4xf32> to vector<1x32x4xf32>
    %22 = vector.broadcast %21 : vector<1x32x4xf32> to vector<2x32x4xf32>
    "tpu.trace_start"() <{level = 10 : i32, message = "bdc,bcl->bdl"}> : () -> ()
    %cst_10 = arith.constant dense<0.000000e+00> : vector<2x32x8xf32>
    %23 = tpu.matmul %22, %19, %cst_10 {dimension_numbers = #tpu.dot_dimension_numbers<[2], [1], [1], [2], [0, 0, 0, 1, 1, 2], [0], [0]>} : vector<2x32x4xf32>, vector<2x4x8xf32>, vector<2x32x8xf32> -> vector<2x32x8xf32>
    "tpu.trace_stop"() : () -> ()
    %c88 = arith.constant 88 : index
    %c0_11 = arith.constant 0 : index
    %24 = vector.load %arg1[%c88, %c0_11] : memref<288x32xf32, #tpu.memory_space<vmem>>, vector<32x1xf32>
    %25 = vector.shape_cast %24 : vector<32x1xf32> to vector<1x32x1xf32>
    %26 = vector.broadcast %25 : vector<1x32x1xf32> to vector<2x32x8xf32>
    %27 = arith.addf %23, %26 : vector<2x32x8xf32>
    %cst_12 = arith.constant 0.000000e+00 : f32
    %28 = vector.broadcast %cst_12 : f32 to vector<2x32x8xf32>
    %29 = arith.maximumf %27, %28 : vector<2x32x8xf32>
    %c120 = arith.constant 120 : index
    %c0_13 = arith.constant 0 : index
    %30 = vector.load %arg1[%c120, %c0_13] : memref<288x32xf32, #tpu.memory_space<vmem>>, vector<4x32xf32>
    %31 = vector.shape_cast %30 : vector<4x32xf32> to vector<1x4x32xf32>
    %32 = vector.broadcast %31 : vector<1x4x32xf32> to vector<2x4x32xf32>
    "tpu.trace_start"() <{level = 10 : i32, message = "bcd,bdl->bcl"}> : () -> ()
    %cst_14 = arith.constant dense<0.000000e+00> : vector<2x4x8xf32>
    %33 = tpu.matmul %32, %29, %cst_14 {dimension_numbers = #tpu.dot_dimension_numbers<[2], [1], [1], [2], [0, 0, 0, 1, 1, 2], [0], [0]>} : vector<2x4x32xf32>, vector<2x32x8xf32>, vector<2x4x8xf32> -> vector<2x4x8xf32>
    "tpu.trace_stop"() : () -> ()
    %34 = arith.addf %19, %33 : vector<2x4x8xf32>
    %c128 = arith.constant 128 : index
    %c0_15 = arith.constant 0 : index
    %35 = vector.load %arg1[%c128, %c0_15] : memref<288x32xf32, #tpu.memory_space<vmem>>, vector<4x1xf32>
    %36 = vector.shape_cast %35 : vector<4x1xf32> to vector<1x4x1xf32>
    %37 = vector.broadcast %36 : vector<1x4x1xf32> to vector<2x4x8xf32>
    %38 = arith.addf %34, %37 : vector<2x4x8xf32>
    %c136 = arith.constant 136 : index
    %c0_16 = arith.constant 0 : index
    %39 = vector.load %arg1[%c136, %c0_16] : memref<288x32xf32, #tpu.memory_space<vmem>>, vector<32x8xf32>
    %40 = vector.shape_cast %39 : vector<32x8xf32> to vector<1x32x8xf32>
    %41 = vector.broadcast %40 : vector<1x32x8xf32> to vector<2x32x8xf32>
    "tpu.trace_start"() <{level = 10 : i32, message = "bcl,bdl->bcd"}> : () -> ()
    %cst_17 = arith.constant dense<0.000000e+00> : vector<2x4x32xf32>
    %42 = tpu.matmul %38, %41, %cst_17 {dimension_numbers = #tpu.dot_dimension_numbers<[2], [2], [1], [1], [0, 0, 0, 1, 1, 1], [0], [0]>} : vector<2x4x8xf32>, vector<2x32x8xf32>, vector<2x4x32xf32> -> vector<2x4x32xf32>
    "tpu.trace_stop"() : () -> ()
    %c168 = arith.constant 168 : index
    %c0_18 = arith.constant 0 : index
    %43 = vector.load %arg1[%c168, %c0_18] : memref<288x32xf32, #tpu.memory_space<vmem>>, vector<1x32xf32>
    %44 = vector.shape_cast %43 : vector<1x32xf32> to vector<1x1x32xf32>
    %45 = vector.broadcast %44 : vector<1x1x32xf32> to vector<2x4x32xf32>
    %46 = arith.addf %42, %45 : vector<2x4x32xf32>
    %cst_19 = arith.constant 0.000000e+00 : f32
    %47 = vector.broadcast %cst_19 : f32 to vector<2x4x32xf32>
    %48 = arith.maximumf %46, %47 : vector<2x4x32xf32>
    %c176 = arith.constant 176 : index
    %c0_20 = arith.constant 0 : index
    %49 = vector.load %arg1[%c176, %c0_20] : memref<288x32xf32, #tpu.memory_space<vmem>>, vector<8x32xf32>
    %50 = vector.shape_cast %49 : vector<8x32xf32> to vector<1x8x32xf32>
    %51 = vector.broadcast %50 : vector<1x8x32xf32> to vector<2x8x32xf32>
    "tpu.trace_start"() <{level = 10 : i32, message = "bcd,bld->bcl"}> : () -> ()
    %cst_21 = arith.constant dense<0.000000e+00> : vector<2x4x8xf32>
    %52 = tpu.matmul %48, %51, %cst_21 {dimension_numbers = #tpu.dot_dimension_numbers<[2], [2], [1], [1], [0, 0, 0, 1, 1, 1], [0], [0]>} : vector<2x4x32xf32>, vector<2x8x32xf32>, vector<2x4x8xf32> -> vector<2x4x8xf32>
    "tpu.trace_stop"() : () -> ()
    %53 = arith.addf %38, %52 : vector<2x4x8xf32>
    %c184 = arith.constant 184 : index
    %c0_22 = arith.constant 0 : index
    %54 = vector.load %arg1[%c184, %c0_22] : memref<288x32xf32, #tpu.memory_space<vmem>>, vector<1x8xf32>
    %55 = vector.shape_cast %54 : vector<1x8xf32> to vector<1x1x8xf32>
    %56 = vector.broadcast %55 : vector<1x1x8xf32> to vector<2x4x8xf32>
    %57 = arith.addf %53, %56 : vector<2x4x8xf32>
    %c192 = arith.constant 192 : index
    %c0_23 = arith.constant 0 : index
    %58 = vector.load %arg1[%c192, %c0_23] : memref<288x32xf32, #tpu.memory_space<vmem>>, vector<32x4xf32>
    %59 = vector.shape_cast %58 : vector<32x4xf32> to vector<1x32x4xf32>
    %60 = vector.broadcast %59 : vector<1x32x4xf32> to vector<2x32x4xf32>
    "tpu.trace_start"() <{level = 10 : i32, message = "bdc,bcl->bdl"}> : () -> ()
    %cst_24 = arith.constant dense<0.000000e+00> : vector<2x32x8xf32>
    %61 = tpu.matmul %60, %57, %cst_24 {dimension_numbers = #tpu.dot_dimension_numbers<[2], [1], [1], [2], [0, 0, 0, 1, 1, 2], [0], [0]>} : vector<2x32x4xf32>, vector<2x4x8xf32>, vector<2x32x8xf32> -> vector<2x32x8xf32>
    "tpu.trace_stop"() : () -> ()
    %c224 = arith.constant 224 : index
    %c0_25 = arith.constant 0 : index
    %62 = vector.load %arg1[%c224, %c0_25] : memref<288x32xf32, #tpu.memory_space<vmem>>, vector<32x1xf32>
    %63 = vector.shape_cast %62 : vector<32x1xf32> to vector<1x32x1xf32>
    %64 = vector.broadcast %63 : vector<1x32x1xf32> to vector<2x32x8xf32>
    %65 = arith.addf %61, %64 : vector<2x32x8xf32>
    %cst_26 = arith.constant 0.000000e+00 : f32
    %66 = vector.broadcast %cst_26 : f32 to vector<2x32x8xf32>
    %67 = arith.maximumf %65, %66 : vector<2x32x8xf32>
    %c256 = arith.constant 256 : index
    %c0_27 = arith.constant 0 : index
    %68 = vector.load %arg1[%c256, %c0_27] : memref<288x32xf32, #tpu.memory_space<vmem>>, vector<4x32xf32>
    %69 = vector.shape_cast %68 : vector<4x32xf32> to vector<1x4x32xf32>
    %70 = vector.broadcast %69 : vector<1x4x32xf32> to vector<2x4x32xf32>
    "tpu.trace_start"() <{level = 10 : i32, message = "bcd,bdl->bcl"}> : () -> ()
    %cst_28 = arith.constant dense<0.000000e+00> : vector<2x4x8xf32>
    %71 = tpu.matmul %70, %67, %cst_28 {dimension_numbers = #tpu.dot_dimension_numbers<[2], [1], [1], [2], [0, 0, 0, 1, 1, 2], [0], [0]>} : vector<2x4x32xf32>, vector<2x32x8xf32>, vector<2x4x8xf32> -> vector<2x4x8xf32>
    "tpu.trace_stop"() : () -> ()
    %72 = arith.addf %57, %71 : vector<2x4x8xf32>
    %c264 = arith.constant 264 : index
    %c0_29 = arith.constant 0 : index
    %73 = vector.load %arg1[%c264, %c0_29] : memref<288x32xf32, #tpu.memory_space<vmem>>, vector<4x1xf32>
    %74 = vector.shape_cast %73 : vector<4x1xf32> to vector<1x4x1xf32>
    %75 = vector.broadcast %74 : vector<1x4x1xf32> to vector<2x4x8xf32>
    %76 = arith.addf %72, %75 : vector<2x4x8xf32>
    %c272 = arith.constant 272 : index
    %c0_30 = arith.constant 0 : index
    %77 = vector.load %arg1[%c272, %c0_30] : memref<288x32xf32, #tpu.memory_space<vmem>>, vector<8x8xf32>
    %78 = vector.shape_cast %77 : vector<8x8xf32> to vector<1x8x8xf32>
    %79 = vector.broadcast %78 : vector<1x8x8xf32> to vector<2x8x8xf32>
    "tpu.trace_start"() <{level = 10 : i32, message = "bcl,bpl->bcp"}> : () -> ()
    %cst_31 = arith.constant dense<0.000000e+00> : vector<2x4x8xf32>
    %80 = tpu.matmul %76, %79, %cst_31 {dimension_numbers = #tpu.dot_dimension_numbers<[2], [2], [1], [1], [0, 0, 0, 1, 1, 1], [0], [0]>} : vector<2x4x8xf32>, vector<2x8x8xf32>, vector<2x4x8xf32> -> vector<2x4x8xf32>
    "tpu.trace_stop"() : () -> ()
    %c280 = arith.constant 280 : index
    %c0_32 = arith.constant 0 : index
    %81 = vector.load %arg1[%c280, %c0_32] : memref<288x32xf32, #tpu.memory_space<vmem>>, vector<1x8xf32>
    %82 = vector.shape_cast %81 : vector<1x8xf32> to vector<1x1x8xf32>
    %83 = vector.broadcast %82 : vector<1x1x8xf32> to vector<2x4x8xf32>
    %84 = arith.addf %80, %83 : vector<2x4x8xf32>
    %c0_33 = arith.constant 0 : index
    %c0_34 = arith.constant 0 : index
    %c0_35 = arith.constant 0 : index
    %85 = vector.load %arg2[%c0_33, %c0_34, %c0_35] : memref<2x4x8xf32, #tpu.memory_space<vmem>>, vector<2x4x8xf32>
    tpu.vector_store %arg2[%c0_33, %c0_34, %c0_35], %84 {strides = array<i32>} : memref<2x4x8xf32, #tpu.memory_space<vmem>>, vector<2x4x8xf32>,
    return
  }
}

</mosaic_0001>

<llo_original>
// kernel: tsmixer_forward.1
$region0: #{tsmixer_forward.1}
  #allocation0 [shape = 'u32[]', space=smem, size = 0x4, offset = 0x4, fixed_abs, tag = 'smem constant byte address 0x4 - core index']
  #allocation1 [shape = 'u32[144,128]{1,0:T(1,128)}', space=vmem, size = 0x12000, scoped, tag = 'internal scratch']
  %s0 = inlined_call_operand.vmem [shape: f32[2,4,8], index: 0, kind: input, shape index: {}]
  %s1 = inlined_call_operand.vmem [shape: f32[288,32], index: 1, kind: input, shape index: {}]
  %s2 = inlined_call_operand.vmem [shape: f32[2,4,8], index: 2, kind: output, shape index: {}]
  %s3 = sld [smem:[#allocation0]]
  $region18: #{tsmixer_forward.1} parent=0
    _
  %s5 = ssub.s32 1, %s3
  %s6 = scalar_select 0, %s5, %s3
  // Predicated region
  $region2: #{tsmixer_forward.1} parent=0 // pred_check
    _
  $region3: #{tsmixer_forward.1} parent=0 // pred_check_branch
    %8 = sbr.rel (0) target = $region5
  $region4: #{tsmixer_forward.1} parent=0 // pred_region
    _
  $region5: #{tsmixer_forward.1} parent=0 // pred_fallthru
    _
  // Predicated region
  $region6: #{tsmixer_forward.1} parent=0 // pred_check
    _
  $region7: #{tsmixer_forward.1} parent=0 // pred_check_branch
    %10 = sbr.rel (0) target = $region9
  $region8: #{tsmixer_forward.1} parent=0 // pred_region
    _
  $region9: #{tsmixer_forward.1} parent=0 // pred_fallthru
    _
  %v11 = vld [vmem:[%s0] sm:$0xf]
  %v12 = vld [vmem:[%s0 + $0x4] sm:$0xf]
  %v13 = vld [vmem:[%s1] sm:$0xff]
  %v14 = vld [vmem:[%s1 + $0x8] sm:$0xff]
  %v15 = vld [vmem:[%s1 + $0x10] sm:$0xff]
  %v16 = vld [vmem:[%s1 + $0x18] sm:$0xff]
  %v17 = vld [vmem:[%s1 + $0x20] sm:$0x1]
  %v18 = vlaneseq
  %v19 = vshrl.u32 %v18, 7
  %v20 = vsub.s32 0, %v19
  %v21 = vrot.slane %v17, %v20
  %vm22 = vcmask 64512
  %v24 = vsel %vm22, %v11, 0
  %v27 = vsel %vm22, %v13, 0
  %v30 = vsel %vm22, %v14, 0
  %v33 = vsel %vm22, %v15, 0
  %v36 = vsel %vm22, %v16, 0
  %38 = vmatprep.subr.mxu0 0.0
  %39 = vmatpush1.xpose.msra.mxu0 %v27
  %40 = vmatprep.subr.mxu0 0.0
  %41 = vmatpush1.xpose.msra.mxu0 %v30
  %42 = vmatprep.subr.mxu0 0.0
  %43 = vmatpush1.xpose.msra.mxu0 %v33
  %44 = vmatprep.subr.mxu0 0.0
  %45 = vmatpush1.xpose.msra.mxu0 %v36
  %46 = vmatprep.subr.mxu0 0.0
  %47 = vmatpush1.xpose.msra.mxu0 0.0
  %48 = vmatprep.subr.mxu0 0.0
  %49 = vmatpush1.xpose.msra.mxu0 0.0
  %50 = vmatprep.subr.mxu0 0.0
  %51 = vmatpush1.xpose.msra.mxu0 0.0
  %52 = vmatprep.subr.mxu0 0.0
  %53 = vmatpush1.xpose.msra.mxu0 0.0
  %54 = vmatprep.subr.mxu0 0.0
  %55 = vmatpush1.xpose.msra.mxu0 0.0
  %56 = vmatprep.subr.mxu0 0.0
  %57 = vmatpush1.xpose.msra.mxu0 0.0
  %58 = vmatprep.subr.mxu0 0.0
  %59 = vmatpush1.xpose.msra.mxu0 0.0
  %60 = vmatprep.subr.mxu0 0.0
  %61 = vmatpush1.xpose.msra.mxu0 0.0
  %62 = vmatprep.subr.mxu0 0.0
  %63 = vmatpush1.xpose.msra.mxu0 0.0
  %64 = vmatprep.subr.mxu0 0.0
  %65 = vmatpush1.xpose.msra.mxu0 0.0
  %66 = vmatprep.subr.mxu0 0.0
  %67 = vmatpush1.xpose.msra.mxu0 0.0
  %68 = vmatprep.subr.mxu0 0.0
  %69 = vmatpush1.xpose.msra.mxu0 0.0
  %70 = vmatprep.subr.mxu0 0.0
  %71 = vmatpush1.xpose.msra.mxu0 0.0
  %72 = vmatprep.subr.mxu0 0.0
  %73 = vmatpush1.xpose.msra.mxu0 0.0
  %74 = vmatprep.subr.mxu0 0.0
  %75 = vmatpush1.xpose.msra.mxu0 0.0
  %76 = vmatprep.subr.mxu0 0.0
  %77 = vmatpush1.xpose.msra.mxu0 0.0
  %78 = vmatprep.subr.mxu0 0.0
  %79 = vmatpush1.xpose.msra.mxu0 0.0
  %80 = vmatprep.subr.mxu0 0.0
  %81 = vmatpush1.xpose.msra.mxu0 0.0
  %82 = vmatprep.subr.mxu0 0.0
  %83 = vmatpush1.xpose.msra.mxu0 0.0
  %84 = vmatprep.subr.mxu0 0.0
  %85 = vmatpush1.xpose.msra.mxu0 0.0
  %86 = vmatprep.subr.mxu0 0.0
  %87 = vmatpush1.xpose.msra.mxu0 0.0
  %88 = vmatprep.subr.mxu0 0.0
  %89 = vmatpush1.xpose.msra.mxu0 0.0
  %90 = vmatprep.subr.mxu0 0.0
  %91 = vmatpush1.xpose.msra.mxu0 0.0
  %92 = vmatprep.subr.mxu0 0.0
  %93 = vmatpush1.xpose.msra.mxu0 0.0
  %94 = vmatprep.subr.mxu0 0.0
  %95 = vmatpush1.xpose.msra.mxu0 0.0
  %96 = vmatprep.subr.mxu0 0.0
  %97 = vmatpush1.xpose.msra.mxu0 0.0
  %98 = vmatprep.subr.mxu0 0.0
  %99 = vmatpush1.xpose.msra.mxu0 0.0
  %100 = vmatprep.subr.mxu0 0.0
  %101 = vmatpush1.xpose.msra.mxu0 0.0
  %102 = vmatprep.mubr.f32.mxu0 0.0
  %103 = vmatmul.mubr.f32.gmra.mrb[0].mxu0 %v24
  %v104 = vpop.f32.mrb[0].mxu0
  %v105 = vadd.f32 %v21, %v104
  %v106 = vpop.f32.mrb[0].mxu0
  %107 = vdwg.mxu0
  %v109 = vsel %vm22, %v12, 0
  %111 = vmatprep.subr.mxu0 0.0
  %112 = vmatpush1.xpose.msra.mxu0 %v27
  %113 = vmatprep.subr.mxu0 0.0
  %114 = vmatpush1.xpose.msra.mxu0 %v30
  %115 = vmatprep.subr.mxu0 0.0
  %116 = vmatpush1.xpose.msra.mxu0 %v33
  %117 = vmatprep.subr.mxu0 0.0
  %118 = vmatpush1.xpose.msra.mxu0 %v36
  %119 = vmatprep.subr.mxu0 0.0
  %120 = vmatpush1.xpose.msra.mxu0 0.0
  %121 = vmatprep.subr.mxu0 0.0
  %122 = vmatpush1.xpose.msra.mxu0 0.0
  %123 = vmatprep.subr.mxu0 0.0
  %124 = vmatpush1.xpose.msra.mxu0 0.0
  %125 = vmatprep.subr.mxu0 0.0
  %126 = vmatpush1.xpose.msra.mxu0 0.0
  %127 = vmatprep.subr.mxu0 0.0
  %128 = vmatpush1.xpose.msra.mxu0 0.0
  %129 = vmatprep.subr.mxu0 0.0
  %130 = vmatpush1.xpose.msra.mxu0 0.0
  %131 = vmatprep.subr.mxu0 0.0
  %132 = vmatpush1.xpose.msra.mxu0 0.0
  %133 = vmatprep.subr.mxu0 0.0
  %134 = vmatpush1.xpose.msra.mxu0 0.0
  %135 = vmatprep.subr.mxu0 0.0
  %136 = vmatpush1.xpose.msra.mxu0 0.0
  %137 = vmatprep.subr.mxu0 0.0
  %138 = vmatpush1.xpose.msra.mxu0 0.0
  %139 = vmatprep.subr.mxu0 0.0
  %140 = vmatpush1.xpose.msra.mxu0 0.0
  %141 = vmatprep.subr.mxu0 0.0
  %142 = vmatpush1.xpose.msra.mxu0 0.0
  %143 = vmatprep.subr.mxu0 0.0
  %144 = vmatpush1.xpose.msra.mxu0 0.0
  %145 = vmatprep.subr.mxu0 0.0
  %146 = vmatpush1.xpose.msra.mxu0 0.0
  %147 = vmatprep.subr.mxu0 0.0
  %148 = vmatpush1.xpose.msra.mxu0 0.0
  %149 = vmatprep.subr.mxu0 0.0
  %150 = vmatpush1.xpose.msra.mxu0 0.0
  %151 = vmatprep.subr.mxu0 0.0
  %152 = vmatpush1.xpose.msra.mxu0 0.0
  %153 = vmatprep.subr.mxu0 0.0
  %154 = vmatpush1.xpose.msra.mxu0 0.0
  %155 = vmatprep.subr.mxu0 0.0
  %156 = vmatpush1.xpose.msra.mxu0 0.0
  %157 = vmatprep.subr.mxu0 0.0
  %158 = vmatpush1.xpose.msra.mxu0 0.0
  %159 = vmatprep.subr.mxu0 0.0
  %160 = vmatpush1.xpose.msra.mxu0 0.0
  %161 = vmatprep.subr.mxu0 0.0
  %162 = vmatpush1.xpose.msra.mxu0 0.0
  %163 = vmatprep.subr.mxu0 0.0
  %164 = vmatpush1.xpose.msra.mxu0 0.0
  %165 = vmatprep.subr.mxu0 0.0
  %166 = vmatpush1.xpose.msra.mxu0 0.0
  %167 = vmatprep.subr.mxu0 0.0
  %168 = vmatpush1.xpose.msra.mxu0 0.0
  %169 = vmatprep.subr.mxu0 0.0
  %170 = vmatpush1.xpose.msra.mxu0 0.0
  %171 = vmatprep.subr.mxu0 0.0
  %172 = vmatpush1.xpose.msra.mxu0 0.0
  %173 = vmatprep.subr.mxu0 0.0
  %174 = vmatpush1.xpose.msra.mxu0 0.0
  %175 = vmatprep.mubr.f32.mxu0 0.0
  %176 = vmatmul.mubr.f32.gmra.mrb[0].mxu0 %v109
  %v177 = vpop.f32.mrb[0].mxu0
  %v178 = vadd.f32 %v21, %v177
  %v179 = vpop.f32.mrb[0].mxu0
  %180 = vdwg.mxu0
  %v181 = vmax.f32 %v105, 0.0
  %v182 = vmax.f32 %v178, 0.0
  %v183 = vld [vmem:[%s1 + $0x28] sm:$0xff]
  %vm184 = vcmask 261120
  %v186 = vsel %vm184, %v181, 0
  %v189 = vsel %vm184, %v183, 0
  %191 = vmatprep.subr.mxu0 0.0
  %192 = vmatpush1.xpose.msra.mxu0 %v189
  %193 = vmatprep.subr.mxu0 0.0
  %194 = vmatpush1.xpose.msra.mxu0 0.0
  %195 = vmatprep.subr.mxu0 0.0
  %196 = vmatpush1.xpose.msra.mxu0 0.0
  %197 = vmatprep.subr.mxu0 0.0
  %198 = vmatpush1.xpose.msra.mxu0 0.0
  %199 = vmatprep.subr.mxu0 0.0
  %200 = vmatpush1.xpose.msra.mxu0 0.0
  %201 = vmatprep.subr.mxu0 0.0
  %202 = vmatpush1.xpose.msra.mxu0 0.0
  %203 = vmatprep.subr.mxu0 0.0
  %204 = vmatpush1.xpose.msra.mxu0 0.0
  %205 = vmatprep.subr.mxu0 0.0
  %206 = vmatpush1.xpose.msra.mxu0 0.0
  %207 = vmatprep.subr.mxu0 0.0
  %208 = vmatpush1.xpose.msra.mxu0 0.0
  %209 = vmatprep.subr.mxu0 0.0
  %210 = vmatpush1.xpose.msra.mxu0 0.0
  %211 = vmatprep.subr.mxu0 0.0
  %212 = vmatpush1.xpose.msra.mxu0 0.0
  %213 = vmatprep.subr.mxu0 0.0
  %214 = vmatpush1.xpose.msra.mxu0 0.0
  %215 = vmatprep.subr.mxu0 0.0
  %216 = vmatpush1.xpose.msra.mxu0 0.0
  %217 = vmatprep.subr.mxu0 0.0
  %218 = vmatpush1.xpose.msra.mxu0 0.0
  %219 = vmatprep.subr.mxu0 0.0
  %220 = vmatpush1.xpose.msra.mxu0 0.0
  %221 = vmatprep.subr.mxu0 0.0
  %222 = vmatpush1.xpose.msra.mxu0 0.0
  %223 = vmatprep.subr.mxu0 0.0
  %224 = vmatpush1.xpose.msra.mxu0 0.0
  %225 = vmatprep.subr.mxu0 0.0
  %226 = vmatpush1.xpose.msra.mxu0 0.0
  %227 = vmatprep.subr.mxu0 0.0
  %228 = vmatpush1.xpose.msra.mxu0 0.0
  %229 = vmatprep.subr.mxu0 0.0
  %230 = vmatpush1.xpose.msra.mxu0 0.0
  %231 = vmatprep.subr.mxu0 0.0
  %232 = vmatpush1.xpose.msra.mxu0 0.0
  %233 = vmatprep.subr.mxu0 0.0
  %234 = vmatpush1.xpose.msra.mxu0 0.0
  %235 = vmatprep.subr.mxu0 0.0
  %236 = vmatpush1.xpose.msra.mxu0 0.0
  %237 = vmatprep.subr.mxu0 0.0
  %238 = vmatpush1.xpose.msra.mxu0 0.0
  %239 = vmatprep.subr.mxu0 0.0
  %240 = vmatpush1.xpose.msra.mxu0 0.0
  %241 = vmatprep.subr.mxu0 0.0
  %242 = vmatpush1.xpose.msra.mxu0 0.0
  %243 = vmatprep.subr.mxu0 0.0
  %244 = vmatpush1.xpose.msra.mxu0 0.0
  %245 = vmatprep.subr.mxu0 0.0
  %246 = vmatpush1.xpose.msra.mxu0 0.0
  %247 = vmatprep.subr.mxu0 0.0
  %248 = vmatpush1.xpose.msra.mxu0 0.0
  %249 = vmatprep.subr.mxu0 0.0
  %250 = vmatpush1.xpose.msra.mxu0 0.0
  %251 = vmatprep.subr.mxu0 0.0
  %252 = vmatpush1.xpose.msra.mxu0 0.0
  %253 = vmatprep.subr.mxu0 0.0
  %254 = vmatpush1.xpose.msra.mxu0 0.0
  %255 = vmatprep.mubr.f32.mxu0 0.0
  %256 = vmatmul.mubr.f32.gmra.mrb[0].mxu0 %v186
  %v257 = vpop.f32.mrb[0].mxu0
  %v258 = vadd.f32 0.0, %v257
  %v259 = vpop.f32.mrb[0].mxu0
  %260 = vdwg.mxu0
  %v262 = vsel %vm184, %v182, 0
  %264 = vmatprep.subr.mxu0 0.0
  %265 = vmatpush1.xpose.msra.mxu0 %v189
  %266 = vmatprep.subr.mxu0 0.0
  %267 = vmatpush1.xpose.msra.mxu0 0.0
  %268 = vmatprep.subr.mxu0 0.0
  %269 = vmatpush1.xpose.msra.mxu0 0.0
  %270 = vmatprep.subr.mxu0 0.0
  %271 = vmatpush1.xpose.msra.mxu0 0.0
  %272 = vmatprep.subr.mxu0 0.0
  %273 = vmatpush1.xpose.msra.mxu0 0.0
  %274 = vmatprep.subr.mxu0 0.0
  %275 = vmatpush1.xpose.msra.mxu0 0.0
  %276 = vmatprep.subr.mxu0 0.0
  %277 = vmatpush1.xpose.msra.mxu0 0.0
  %278 = vmatprep.subr.mxu0 0.0
  %279 = vmatpush1.xpose.msra.mxu0 0.0
  %280 = vmatprep.subr.mxu0 0.0
  %281 = vmatpush1.xpose.msra.mxu0 0.0
  %282 = vmatprep.subr.mxu0 0.0
  %283 = vmatpush1.xpose.msra.mxu0 0.0
  %284 = vmatprep.subr.mxu0 0.0
  %285 = vmatpush1.xpose.msra.mxu0 0.0
  %286 = vmatprep.subr.mxu0 0.0
  %287 = vmatpush1.xpose.msra.mxu0 0.0
  %288 = vmatprep.subr.mxu0 0.0
  %289 = vmatpush1.xpose.msra.mxu0 0.0
  %290 = vmatprep.subr.mxu0 0.0
  %291 = vmatpush1.xpose.msra.mxu0 0.0
  %292 = vmatprep.subr.mxu0 0.0
  %293 = vmatpush1.xpose.msra.mxu0 0.0
  %294 = vmatprep.subr.mxu0 0.0
  %295 = vmatpush1.xpose.msra.mxu0 0.0
  %296 = vmatprep.subr.mxu0 0.0
  %297 = vmatpush1.xpose.msra.mxu0 0.0
  %298 = vmatprep.subr.mxu0 0.0
  %299 = vmatpush1.xpose.msra.mxu0 0.0
  %300 = vmatprep.subr.mxu0 0.0
  %301 = vmatpush1.xpose.msra.mxu0 0.0
  %302 = vmatprep.subr.mxu0 0.0
  %303 = vmatpush1.xpose.msra.mxu0 0.0
  %304 = vmatprep.subr.mxu0 0.0
  %305 = vmatpush1.xpose.msra.mxu0 0.0
  %306 = vmatprep.subr.mxu0 0.0
  %307 = vmatpush1.xpose.msra.mxu0 0.0
  %308 = vmatprep.subr.mxu0 0.0
  %309 = vmatpush1.xpose.msra.mxu0 0.0
  %310 = vmatprep.subr.mxu0 0.0
  %311 = vmatpush1.xpose.msra.mxu0 0.0
  %312 = vmatprep.subr.mxu0 0.0
  %313 = vmatpush1.xpose.msra.mxu0 0.0
  %314 = vmatprep.subr.mxu0 0.0
  %315 = vmatpush1.xpose.msra.mxu0 0.0
  %316 = vmatprep.subr.mxu0 0.0
  %317 = vmatpush1.xpose.msra.mxu0 0.0
  %318 = vmatprep.subr.mxu0 0.0
  %319 = vmatpush1.xpose.msra.mxu0 0.0
  %320 = vmatprep.subr.mxu0 0.0
  %321 = vmatpush1.xpose.msra.mxu0 0.0
  %322 = vmatprep.subr.mxu0 0.0
  %323 = vmatpush1.xpose.msra.mxu0 0.0
  %324 = vmatprep.subr.mxu0 0.0
  %325 = vmatpush1.xpose.msra.mxu0 0.0
  %326 = vmatprep.subr.mxu0 0.0
  %327 = vmatpush1.xpose.msra.mxu0 0.0
  %328 = vmatprep.mubr.f32.mxu0 0.0
  %329 = vmatmul.mubr.f32.gmra.mrb[0].mxu0 %v262
  %v330 = vpop.f32.mrb[0].mxu0
  %v331 = vadd.f32 0.0, %v330
  %v332 = vpop.f32.mrb[0].mxu0
  %333 = vdwg.mxu0
  %v334 = vadd.f32 %v11, %v258
  %v335 = vadd.f32 %v12, %v331
  %v336 = vld [vmem:[%s1 + $0x30] sm:$0x1]
  %v337 = vlaneseq
  %v338 = vshrl.u32 %v337, 7
  %v339 = vsub.s32 0, %v338
  %v340 = vrot.slane %v336, %v339
  %v341 = vadd.f32 %v334, %v340
  %v342 = vadd.f32 %v335, %v340
  %v343 = vld [vmem:[%s1 + $0x38] sm:$0xff]
  %v344 = vld [vmem:[%s1 + $0x40] sm:$0xff]
  %v345 = vld [vmem:[%s1 + $0x48] sm:$0xff]
  %v346 = vld [vmem:[%s1 + $0x50] sm:$0xff]
  %v347 = vld [vmem:[%s1 + $0x58] sm:$0xff]
  %v348 = vld [vmem:[%s1 + $0x60] sm:$0xff]
  %v349 = vld [vmem:[%s1 + $0x68] sm:$0xff]
  %v350 = vld [vmem:[%s1 + $0x70] sm:$0xff]
  %352 = vset.pattern.permute.xlu0 0
  %353 = vperm.xlu0 %352, %v347
  %v354 = vpop.permute.xlu0 %353
  %357 = vset.pattern.permute.xlu0 0
  %358 = vperm.xlu0 %357, %v348
  %v359 = vpop.permute.xlu0 %358
  %362 = vset.pattern.permute.xlu0 0
  %363 = vperm.xlu0 %362, %v349
  %v364 = vpop.permute.xlu0 %363
  %367 = vset.pattern.permute.xlu0 0
  %368 = vperm.xlu0 %367, %v350
  %v369 = vpop.permute.xlu0 %368
  %vm371 = vcmask 31744
  %v373 = vsel %vm371, %v343, 0
  %v376 = vsel %vm371, %v344, 0
  %v379 = vsel %vm371, %v345, 0
  %v382 = vsel %vm371, %v346, 0
  %vm384 = vcmask 1043456
  %v386 = vsel %vm384, %v341, 0
  %388 = vmatprep.subr.mxu0 0.0
  %389 = vmatpush1.msra.mxu0 %v386
  %390 = vmatprep.subr.mxu0 0.0
  %391 = vmatpush1.msra.mxu0 0.0
  %392 = vmatprep.subr.mxu0 0.0
  %393 = vmatpush1.msra.mxu0 0.0
  %394 = vmatprep.subr.mxu0 0.0
  %395 = vmatpush1.msra.mxu0 0.0
  %396 = vmatprep.subr.mxu0 0.0
  %397 = vmatpush1.msra.mxu0 0.0
  %398 = vmatprep.subr.mxu0 0.0
  %399 = vmatpush1.msra.mxu0 0.0
  %400 = vmatprep.subr.mxu0 0.0
  %401 = vmatpush1.msra.mxu0 0.0
  %402 = vmatprep.subr.mxu0 0.0
  %403 = vmatpush1.msra.mxu0 0.0
  %404 = vmatprep.subr.mxu0 0.0
  %405 = vmatpush1.msra.mxu0 0.0
  %406 = vmatprep.subr.mxu0 0.0
  %407 = vmatpush1.msra.mxu0 0.0
  %408 = vmatprep.subr.mxu0 0.0
  %409 = vmatpush1.msra.mxu0 0.0
  %410 = vmatprep.subr.mxu0 0.0
  %411 = vmatpush1.msra.mxu0 0.0
  %412 = vmatprep.subr.mxu0 0.0
  %413 = vmatpush1.msra.mxu0 0.0
  %414 = vmatprep.subr.mxu0 0.0
  %415 = vmatpush1.msra.mxu0 0.0
  %416 = vmatprep.subr.mxu0 0.0
  %417 = vmatpush1.msra.mxu0 0.0
  %418 = vmatprep.subr.mxu0 0.0
  %419 = vmatpush1.msra.mxu0 0.0
  %420 = vmatprep.subr.mxu0 0.0
  %421 = vmatpush1.msra.mxu0 0.0
  %422 = vmatprep.subr.mxu0 0.0
  %423 = vmatpush1.msra.mxu0 0.0
  %424 = vmatprep.subr.mxu0 0.0
  %425 = vmatpush1.msra.mxu0 0.0
  %426 = vmatprep.subr.mxu0 0.0
  %427 = vmatpush1.msra.mxu0 0.0
  %428 = vmatprep.subr.mxu0 0.0
  %429 = vmatpush1.msra.mxu0 0.0
  %430 = vmatprep.subr.mxu0 0.0
  %431 = vmatpush1.msra.mxu0 0.0
  %432 = vmatprep.subr.mxu0 0.0
  %433 = vmatpush1.msra.mxu0 0.0
  %434 = vmatprep.subr.mxu0 0.0
  %435 = vmatpush1.msra.mxu0 0.0
  %436 = vmatprep.subr.mxu0 0.0
  %437 = vmatpush1.msra.mxu0 0.0
  %438 = vmatprep.subr.mxu0 0.0
  %439 = vmatpush1.msra.mxu0 0.0
  %440 = vmatprep.subr.mxu0 0.0
  %441 = vmatpush1.msra.mxu0 0.0
  %442 = vmatprep.subr.mxu0 0.0
  %443 = vmatpush1.msra.mxu0 0.0
  %444 = vmatprep.subr.mxu0 0.0
  %445 = vmatpush1.msra.mxu0 0.0
  %446 = vmatprep.subr.mxu0 0.0
  %447 = vmatpush1.msra.mxu0 0.0
  %448 = vmatprep.subr.mxu0 0.0
  %449 = vmatpush1.msra.mxu0 0.0
  %450 = vmatprep.subr.mxu0 0.0
  %451 = vmatpush1.msra.mxu0 0.0
  %452 = vmatprep.mubr.f32.mxu0 0.0
  %453 = vmatmul.mubr.f32.gmra.mrb[0].mxu0 %v373
  %v454 = vpop.f32.mrb[0].mxu0
  %v455 = vadd.f32 %v354, %v454
  %v456 = vpop.f32.mrb[0].mxu0
  %457 = vmatprep.mubr.f32.mxu0 0.0
  %458 = vmatmul.mubr.f32.gmra.mrb[0].mxu0 %v376
  %v459 = vpop.f32.mrb[0].mxu0
  %v460 = vadd.f32 %v359, %v459
  %v461 = vpop.f32.mrb[0].mxu0
  %462 = vmatprep.mubr.f32.mxu0 0.0
  %463 = vmatmul.mubr.f32.gmra.mrb[0].mxu0 %v379
  %v464 = vpop.f32.mrb[0].mxu0
  %v465 = vadd.f32 %v364, %v464
  %v466 = vpop.f32.mrb[0].mxu0
  %467 = vmatprep.mubr.f32.mxu0 0.0
  %468 = vmatmul.mubr.f32.gmra.mrb[0].mxu0 %v382
  %v469 = vpop.f32.mrb[0].mxu0
  %v470 = vadd.f32 %v369, %v469
  %v471 = vpop.f32.mrb[0].mxu0
  %472 = vdwg.mxu0
  %v474 = vsel %vm384, %v342, 0
  %476 = vmatprep.subr.mxu0 0.0
  %477 = vmatpush1.msra.mxu0 %v474
  %478 = vmatprep.subr.mxu0 0.0
  %479 = vmatpush1.msra.mxu0 0.0
  %480 = vmatprep.subr.mxu0 0.0
  %481 = vmatpush1.msra.mxu0 0.0
  %482 = vmatprep.subr.mxu0 0.0
  %483 = vmatpush1.msra.mxu0 0.0
  %484 = vmatprep.subr.mxu0 0.0
  %485 = vmatpush1.msra.mxu0 0.0
  %486 = vmatprep.subr.mxu0 0.0
  %487 = vmatpush1.msra.mxu0 0.0
  %488 = vmatprep.subr.mxu0 0.0
  %489 = vmatpush1.msra.mxu0 0.0
  %490 = vmatprep.subr.mxu0 0.0
  %491 = vmatpush1.msra.mxu0 0.0
  %492 = vmatprep.subr.mxu0 0.0
  %493 = vmatpush1.msra.mxu0 0.0
  %494 = vmatprep.subr.mxu0 0.0
  %495 = vmatpush1.msra.mxu0 0.0
  %496 = vmatprep.subr.mxu0 0.0
  %497 = vmatpush1.msra.mxu0 0.0
  %498 = vmatprep.subr.mxu0 0.0
  %499 = vmatpush1.msra.mxu0 0.0
  %500 = vmatprep.subr.mxu0 0.0
  %501 = vmatpush1.msra.mxu0 0.0
  %502 = vmatprep.subr.mxu0 0.0
  %503 = vmatpush1.msra.mxu0 0.0
  %504 = vmatprep.subr.mxu0 0.0
  %505 = vmatpush1.msra.mxu0 0.0
  %506 = vmatprep.subr.mxu0 0.0
  %507 = vmatpush1.msra.mxu0 0.0
  %508 = vmatprep.subr.mxu0 0.0
  %509 = vmatpush1.msra.mxu0 0.0
  %510 = vmatprep.subr.mxu0 0.0
  %511 = vmatpush1.msra.mxu0 0.0
  %512 = vmatprep.subr.mxu0 0.0
  %513 = vmatpush1.msra.mxu0 0.0
  %514 = vmatprep.subr.mxu0 0.0
  %515 = vmatpush1.msra.mxu0 0.0
  %516 = vmatprep.subr.mxu0 0.0
  %517 = vmatpush1.msra.mxu0 0.0
  %518 = vmatprep.subr.mxu0 0.0
  %519 = vmatpush1.msra.mxu0 0.0
  %520 = vmatprep.subr.mxu0 0.0
  %521 = vmatpush1.msra.mxu0 0.0
  %522 = vmatprep.subr.mxu0 0.0
  %523 = vmatpush1.msra.mxu0 0.0
  %524 = vmatprep.subr.mxu0 0.0
  %525 = vmatpush1.msra.mxu0 0.0
  %526 = vmatprep.subr.mxu0 0.0
  %527 = vmatpush1.msra.mxu0 0.0
  %528 = vmatprep.subr.mxu0 0.0
  %529 = vmatpush1.msra.mxu0 0.0
  %530 = vmatprep.subr.mxu0 0.0
  %531 = vmatpush1.msra.mxu0 0.0
  %532 = vmatprep.subr.mxu0 0.0
  %533 = vmatpush1.msra.mxu0 0.0
  %534 = vmatprep.subr.mxu0 0.0
  %535 = vmatpush1.msra.mxu0 0.0
  %536 = vmatprep.subr.mxu0 0.0
  %537 = vmatpush1.msra.mxu0 0.0
  %538 = vmatprep.subr.mxu0 0.0
  %539 = vmatpush1.msra.mxu0 0.0
  %540 = vmatprep.mubr.f32.mxu0 0.0
  %541 = vmatmul.mubr.f32.gmra.mrb[0].mxu0 %v373
  %v542 = vpop.f32.mrb[0].mxu0
  %v543 = vadd.f32 %v354, %v542
  %v544 = vpop.f32.mrb[0].mxu0
  %545 = vmatprep.mubr.f32.mxu0 0.0
  %546 = vmatmul.mubr.f32.gmra.mrb[0].mxu0 %v376
  %v547 = vpop.f32.mrb[0].mxu0
  %v548 = vadd.f32 %v359, %v547
  %v549 = vpop.f32.mrb[0].mxu0
  %550 = vmatprep.mubr.f32.mxu0 0.0
  %551 = vmatmul.mubr.f32.gmra.mrb[0].mxu0 %v379
  %v552 = vpop.f32.mrb[0].mxu0
  %v553 = vadd.f32 %v364, %v552
  %v554 = vpop.f32.mrb[0].mxu0
  %555 = vmatprep.mubr.f32.mxu0 0.0
  %556 = vmatmul.mubr.f32.gmra.mrb[0].mxu0 %v382
  %v557 = vpop.f32.mrb[0].mxu0
  %v558 = vadd.f32 %v369, %v557
  %v559 = vpop.f32.mrb[0].mxu0
  %560 = vdwg.mxu0
  %v561 = vmax.f32 %v455, 0.0
  %v562 = vmax.f32 %v460, 0.0
  %v563 = vmax.f32 %v465, 0.0
  %v564 = vmax.f32 %v470, 0.0
  %v565 = vmax.f32 %v543, 0.0
  %v566 = vmax.f32 %v548, 0.0
  %v567 = vmax.f32 %v553, 0.0
  %v568 = vmax.f32 %v558, 0.0
  %v569 = vld [vmem:[%s1 + $0x78] sm:$0xf]
  %v571 = vsel %vm184, %v569, 0
  %573 = vmatprep.subr.mxu0 0.0
  %574 = vmatpush1.msra.mxu0 %v561
  %575 = vmatprep.subr.mxu0 0.0
  %576 = vmatpush1.msra.mxu0 %v562
  %577 = vmatprep.subr.mxu0 0.0
  %578 = vmatpush1.msra.mxu0 %v563
  %579 = vmatprep.subr.mxu0 0.0
  %580 = vmatpush1.msra.mxu0 %v564
  %581 = vmatprep.subr.mxu0 0.0
  %582 = vmatpush1.msra.mxu0 0.0
  %583 = vmatprep.subr.mxu0 0.0
  %584 = vmatpush1.msra.mxu0 0.0
  %585 = vmatprep.subr.mxu0 0.0
  %586 = vmatpush1.msra.mxu0 0.0
  %587 = vmatprep.subr.mxu0 0.0
  %588 = vmatpush1.msra.mxu0 0.0
  %589 = vmatprep.subr.mxu0 0.0
  %590 = vmatpush1.msra.mxu0 0.0
  %591 = vmatprep.subr.mxu0 0.0
  %592 = vmatpush1.msra.mxu0 0.0
  %593 = vmatprep.subr.mxu0 0.0
  %594 = vmatpush1.msra.mxu0 0.0
  %595 = vmatprep.subr.mxu0 0.0
  %596 = vmatpush1.msra.mxu0 0.0
  %597 = vmatprep.subr.mxu0 0.0
  %598 = vmatpush1.msra.mxu0 0.0
  %599 = vmatprep.subr.mxu0 0.0
  %600 = vmatpush1.msra.mxu0 0.0
  %601 = vmatprep.subr.mxu0 0.0
  %602 = vmatpush1.msra.mxu0 0.0
  %603 = vmatprep.subr.mxu0 0.0
  %604 = vmatpush1.msra.mxu0 0.0
  %605 = vmatprep.subr.mxu0 0.0
  %606 = vmatpush1.msra.mxu0 0.0
  %607 = vmatprep.subr.mxu0 0.0
  %608 = vmatpush1.msra.mxu0 0.0
  %609 = vmatprep.subr.mxu0 0.0
  %610 = vmatpush1.msra.mxu0 0.0
  %611 = vmatprep.subr.mxu0 0.0
  %612 = vmatpush1.msra.mxu0 0.0
  %613 = vmatprep.subr.mxu0 0.0
  %614 = vmatpush1.msra.mxu0 0.0
  %615 = vmatprep.subr.mxu0 0.0
  %616 = vmatpush1.msra.mxu0 0.0
  %617 = vmatprep.subr.mxu0 0.0
  %618 = vmatpush1.msra.mxu0 0.0
  %619 = vmatprep.subr.mxu0 0.0
  %620 = vmatpush1.msra.mxu0 0.0
  %621 = vmatprep.subr.mxu0 0.0
  %622 = vmatpush1.msra.mxu0 0.0
  %623 = vmatprep.subr.mxu0 0.0
  %624 = vmatpush1.msra.mxu0 0.0
  %625 = vmatprep.subr.mxu0 0.0
  %626 = vmatpush1.msra.mxu0 0.0
  %627 = vmatprep.subr.mxu0 0.0
  %628 = vmatpush1.msra.mxu0 0.0
  %629 = vmatprep.subr.mxu0 0.0
  %630 = vmatpush1.msra.mxu0 0.0
  %631 = vmatprep.subr.mxu0 0.0
  %632 = vmatpush1.msra.mxu0 0.0
  %633 = vmatprep.subr.mxu0 0.0
  %634 = vmatpush1.msra.mxu0 0.0
  %635 = vmatprep.subr.mxu0 0.0
  %636 = vmatpush1.msra.mxu0 0.0
  %637 = vmatprep.mubr.f32.mxu0 0.0
  %638 = vmatmul.mubr.f32.gmra.mrb[0].mxu0 %v571
  %v639 = vpop.f32.mrb[0].mxu0
  %v640 = vadd.f32 0.0, %v639
  %v641 = vpop.f32.mrb[0].mxu0
  %642 = vdwg.mxu0
  %643 = vmatprep.subr.mxu0 0.0
  %644 = vmatpush1.msra.mxu0 %v565
  %645 = vmatprep.subr.mxu0 0.0
  %646 = vmatpush1.msra.mxu0 %v566
  %647 = vmatprep.subr.mxu0 0.0
  %648 = vmatpush1.msra.mxu0 %v567
  %649 = vmatprep.subr.mxu0 0.0
  %650 = vmatpush1.msra.mxu0 %v568
  %651 = vmatprep.subr.mxu0 0.0
  %652 = vmatpush1.msra.mxu0 0.0
  %653 = vmatprep.subr.mxu0 0.0
  %654 = vmatpush1.msra.mxu0 0.0
  %655 = vmatprep.subr.mxu0 0.0
  %656 = vmatpush1.msra.mxu0 0.0
  %657 = vmatprep.subr.mxu0 0.0
  %658 = vmatpush1.msra.mxu0 0.0
  %659 = vmatprep.subr.mxu0 0.0
  %660 = vmatpush1.msra.mxu0 0.0
  %661 = vmatprep.subr.mxu0 0.0
  %662 = vmatpush1.msra.mxu0 0.0
  %663 = vmatprep.subr.mxu0 0.0
  %664 = vmatpush1.msra.mxu0 0.0
  %665 = vmatprep.subr.mxu0 0.0
  %666 = vmatpush1.msra.mxu0 0.0
  %667 = vmatprep.subr.mxu0 0.0
  %668 = vmatpush1.msra.mxu0 0.0
  %669 = vmatprep.subr.mxu0 0.0
  %670 = vmatpush1.msra.mxu0 0.0
  %671 = vmatprep.subr.mxu0 0.0
  %672 = vmatpush1.msra.mxu0 0.0
  %673 = vmatprep.subr.mxu0 0.0
  %674 = vmatpush1.msra.mxu0 0.0
  %675 = vmatprep.subr.mxu0 0.0
  %676 = vmatpush1.msra.mxu0 0.0
  %677 = vmatprep.subr.mxu0 0.0
  %678 = vmatpush1.msra.mxu0 0.0
  %679 = vmatprep.subr.mxu0 0.0
  %680 = vmatpush1.msra.mxu0 0.0
  %681 = vmatprep.subr.mxu0 0.0
  %682 = vmatpush1.msra.mxu0 0.0
  %683 = vmatprep.subr.mxu0 0.0
  %684 = vmatpush1.msra.mxu0 0.0
  %685 = vmatprep.subr.mxu0 0.0
  %686 = vmatpush1.msra.mxu0 0.0
  %687 = vmatprep.subr.mxu0 0.0
  %688 = vmatpush1.msra.mxu0 0.0
  %689 = vmatprep.subr.mxu0 0.0
  %690 = vmatpush1.msra.mxu0 0.0
  %691 = vmatprep.subr.mxu0 0.0
  %692 = vmatpush1.msra.mxu0 0.0
  %693 = vmatprep.subr.mxu0 0.0
  %694 = vmatpush1.msra.mxu0 0.0
  %695 = vmatprep.subr.mxu0 0.0
  %696 = vmatpush1.msra.mxu0 0.0
  %697 = vmatprep.subr.mxu0 0.0
  %698 = vmatpush1.msra.mxu0 0.0
  %699 = vmatprep.subr.mxu0 0.0
  %700 = vmatpush1.msra.mxu0 0.0
  %701 = vmatprep.subr.mxu0 0.0
  %702 = vmatpush1.msra.mxu0 0.0
  %703 = vmatprep.subr.mxu0 0.0
  %704 = vmatpush1.msra.mxu0 0.0
  %705 = vmatprep.subr.mxu0 0.0
  %706 = vmatpush1.msra.mxu0 0.0
  %707 = vmatprep.mubr.f32.mxu0 0.0
  %708 = vmatmul.mubr.f32.gmra.mrb[0].mxu0 %v571
  %v709 = vpop.f32.mrb[0].mxu0
  %v710 = vadd.f32 0.0, %v709
  %v711 = vpop.f32.mrb[0].mxu0
  %712 = vdwg.mxu0
  %v713 = vadd.f32 %v341, %v640
  %v714 = vadd.f32 %v342, %v710
  %v715 = vld [vmem:[%s1 + $0x80] sm:$0xf]
  %717 = vset.pattern.permute.xlu0 0
  %718 = vperm.xlu0 %717, %v715
  %v719 = vpop.permute.xlu0 %718
  %v721 = vadd.f32 %v713, %v719
  %v722 = vadd.f32 %v714, %v719
  %v723 = vld [vmem:[%s1 + $0x88] sm:$0xff]
  %v724 = vld [vmem:[%s1 + $0x90] sm:$0xff]
  %v725 = vld [vmem:[%s1 + $0x98] sm:$0xff]
  %v726 = vld [vmem:[%s1 + $0xa0] sm:$0xff]
  %v727 = vld [vmem:[%s1 + $0xa8] sm:$0x1]
  %v728 = vlaneseq
  %v729 = vshrl.u32 %v728, 7
  %v730 = vsub.s32 0, %v729
  %v731 = vrot.slane %v727, %v730
  %v733 = vsel %vm22, %v721, 0
  %v736 = vsel %vm22, %v723, 0
  %v739 = vsel %vm22, %v724, 0
  %v742 = vsel %vm22, %v725, 0
  %v745 = vsel %vm22, %v726, 0
  %747 = vmatprep.subr.mxu0 0.0
  %748 = vmatpush1.xpose.msra.mxu0 %v736
  %749 = vmatprep.subr.mxu0 0.0
  %750 = vmatpush1.xpose.msra.mxu0 %v739
  %751 = vmatprep.subr.mxu0 0.0
  %752 = vmatpush1.xpose.msra.mxu0 %v742
  %753 = vmatprep.subr.mxu0 0.0
  %754 = vmatpush1.xpose.msra.mxu0 %v745
  %755 = vmatprep.subr.mxu0 0.0
  %756 = vmatpush1.xpose.msra.mxu0 0.0
  %757 = vmatprep.subr.mxu0 0.0
  %758 = vmatpush1.xpose.msra.mxu0 0.0
  %759 = vmatprep.subr.mxu0 0.0
  %760 = vmatpush1.xpose.msra.mxu0 0.0
  %761 = vmatprep.subr.mxu0 0.0
  %762 = vmatpush1.xpose.msra.mxu0 0.0
  %763 = vmatprep.subr.mxu0 0.0
  %764 = vmatpush1.xpose.msra.mxu0 0.0
  %765 = vmatprep.subr.mxu0 0.0
  %766 = vmatpush1.xpose.msra.mxu0 0.0
  %767 = vmatprep.subr.mxu0 0.0
  %768 = vmatpush1.xpose.msra.mxu0 0.0
  %769 = vmatprep.subr.mxu0 0.0
  %770 = vmatpush1.xpose.msra.mxu0 0.0
  %771 = vmatprep.subr.mxu0 0.0
  %772 = vmatpush1.xpose.msra.mxu0 0.0
  %773 = vmatprep.subr.mxu0 0.0
  %774 = vmatpush1.xpose.msra.mxu0 0.0
  %775 = vmatprep.subr.mxu0 0.0
  %776 = vmatpush1.xpose.msra.mxu0 0.0
  %777 = vmatprep.subr.mxu0 0.0
  %778 = vmatpush1.xpose.msra.mxu0 0.0
  %779 = vmatprep.subr.mxu0 0.0
  %780 = vmatpush1.xpose.msra.mxu0 0.0
  %781 = vmatprep.subr.mxu0 0.0
  %782 = vmatpush1.xpose.msra.mxu0 0.0
  %783 = vmatprep.subr.mxu0 0.0
  %784 = vmatpush1.xpose.msra.mxu0 0.0
  %785 = vmatprep.subr.mxu0 0.0
  %786 = vmatpush1.xpose.msra.mxu0 0.0
  %787 = vmatprep.subr.mxu0 0.0
  %788 = vmatpush1.xpose.msra.mxu0 0.0
  %789 = vmatprep.subr.mxu0 0.0
  %790 = vmatpush1.xpose.msra.mxu0 0.0
  %791 = vmatprep.subr.mxu0 0.0
  %792 = vmatpush1.xpose.msra.mxu0 0.0
  %793 = vmatprep.subr.mxu0 0.0
  %794 = vmatpush1.xpose.msra.mxu0 0.0
  %795 = vmatprep.subr.mxu0 0.0
  %796 = vmatpush1.xpose.msra.mxu0 0.0
  %797 = vmatprep.subr.mxu0 0.0
  %798 = vmatpush1.xpose.msra.mxu0 0.0
  %799 = vmatprep.subr.mxu0 0.0
  %800 = vmatpush1.xpose.msra.mxu0 0.0
  %801 = vmatprep.subr.mxu0 0.0
  %802 = vmatpush1.xpose.msra.mxu0 0.0
  %803 = vmatprep.subr.mxu0 0.0
  %804 = vmatpush1.xpose.msra.mxu0 0.0
  %805 = vmatprep.subr.mxu0 0.0
  %806 = vmatpush1.xpose.msra.mxu0 0.0
  %807 = vmatprep.subr.mxu0 0.0
  %808 = vmatpush1.xpose.msra.mxu0 0.0
  %809 = vmatprep.subr.mxu0 0.0
  %810 = vmatpush1.xpose.msra.mxu0 0.0
  %811 = vmatprep.mubr.f32.mxu0 0.0
  %812 = vmatmul.mubr.f32.gmra.mrb[0].mxu0 %v733
  %v813 = vpop.f32.mrb[0].mxu0
  %v814 = vadd.f32 %v731, %v813
  %v815 = vpop.f32.mrb[0].mxu0
  %816 = vdwg.mxu0
  %v818 = vsel %vm22, %v722, 0
  %820 = vmatprep.subr.mxu0 0.0
  %821 = vmatpush1.xpose.msra.mxu0 %v736
  %822 = vmatprep.subr.mxu0 0.0
  %823 = vmatpush1.xpose.msra.mxu0 %v739
  %824 = vmatprep.subr.mxu0 0.0
  %825 = vmatpush1.xpose.msra.mxu0 %v742
  %826 = vmatprep.subr.mxu0 0.0
  %827 = vmatpush1.xpose.msra.mxu0 %v745
  %828 = vmatprep.subr.mxu0 0.0
  %829 = vmatpush1.xpose.msra.mxu0 0.0
  %830 = vmatprep.subr.mxu0 0.0
  %831 = vmatpush1.xpose.msra.mxu0 0.0
  %832 = vmatprep.subr.mxu0 0.0
  %833 = vmatpush1.xpose.msra.mxu0 0.0
  %834 = vmatprep.subr.mxu0 0.0
  %835 = vmatpush1.xpose.msra.mxu0 0.0
  %836 = vmatprep.subr.mxu0 0.0
  %837 = vmatpush1.xpose.msra.mxu0 0.0
  %838 = vmatprep.subr.mxu0 0.0
  %839 = vmatpush1.xpose.msra.mxu0 0.0
  %840 = vmatprep.subr.mxu0 0.0
  %841 = vmatpush1.xpose.msra.mxu0 0.0
  %842 = vmatprep.subr.mxu0 0.0
  %843 = vmatpush1.xpose.msra.mxu0 0.0
  %844 = vmatprep.subr.mxu0 0.0
  %845 = vmatpush1.xpose.msra.mxu0 0.0
  %846 = vmatprep.subr.mxu0 0.0
  %847 = vmatpush1.xpose.msra.mxu0 0.0
  %848 = vmatprep.subr.mxu0 0.0
  %849 = vmatpush1.xpose.msra.mxu0 0.0
  %850 = vmatprep.subr.mxu0 0.0
  %851 = vmatpush1.xpose.msra.mxu0 0.0
  %852 = vmatprep.subr.mxu0 0.0
  %853 = vmatpush1.xpose.msra.mxu0 0.0
  %854 = vmatprep.subr.mxu0 0.0
  %855 = vmatpush1.xpose.msra.mxu0 0.0
  %856 = vmatprep.subr.mxu0 0.0
  %857 = vmatpush1.xpose.msra.mxu0 0.0
  %858 = vmatprep.subr.mxu0 0.0
  %859 = vmatpush1.xpose.msra.mxu0 0.0
  %860 = vmatprep.subr.mxu0 0.0
  %861 = vmatpush1.xpose.msra.mxu0 0.0
  %862 = vmatprep.subr.mxu0 0.0
  %863 = vmatpush1.xpose.msra.mxu0 0.0
  %864 = vmatprep.subr.mxu0 0.0
  %865 = vmatpush1.xpose.msra.mxu0 0.0
  %866 = vmatprep.subr.mxu0 0.0
  %867 = vmatpush1.xpose.msra.mxu0 0.0
  %868 = vmatprep.subr.mxu0 0.0
  %869 = vmatpush1.xpose.msra.mxu0 0.0
  %870 = vmatprep.subr.mxu0 0.0
  %871 = vmatpush1.xpose.msra.mxu0 0.0
  %872 = vmatprep.subr.mxu0 0.0
  %873 = vmatpush1.xpose.msra.mxu0 0.0
  %874 = vmatprep.subr.mxu0 0.0
  %875 = vmatpush1.xpose.msra.mxu0 0.0
  %876 = vmatprep.subr.mxu0 0.0
  %877 = vmatpush1.xpose.msra.mxu0 0.0
  %878 = vmatprep.subr.mxu0 0.0
  %879 = vmatpush1.xpose.msra.mxu0 0.0
  %880 = vmatprep.subr.mxu0 0.0
  %881 = vmatpush1.xpose.msra.mxu0 0.0
  %882 = vmatprep.subr.mxu0 0.0
  %883 = vmatpush1.xpose.msra.mxu0 0.0
  %884 = vmatprep.mubr.f32.mxu0 0.0
  %885 = vmatmul.mubr.f32.gmra.mrb[0].mxu0 %v818
  %v886 = vpop.f32.mrb[0].mxu0
  %v887 = vadd.f32 %v731, %v886
  %v888 = vpop.f32.mrb[0].mxu0
  %889 = vdwg.mxu0
  %v890 = vmax.f32 %v814, 0.0
  %v891 = vmax.f32 %v887, 0.0
  %v892 = vld [vmem:[%s1 + $0xb0] sm:$0xff]
  %v894 = vsel %vm184, %v890, 0
  %v897 = vsel %vm184, %v892, 0
  %899 = vmatprep.subr.mxu0 0.0
  %900 = vmatpush1.xpose.msra.mxu0 %v897
  %901 = vmatprep.subr.mxu0 0.0
  %902 = vmatpush1.xpose.msra.mxu0 0.0
  %903 = vmatprep.subr.mxu0 0.0
  %904 = vmatpush1.xpose.msra.mxu0 0.0
  %905 = vmatprep.subr.mxu0 0.0
  %906 = vmatpush1.xpose.msra.mxu0 0.0
  %907 = vmatprep.subr.mxu0 0.0
  %908 = vmatpush1.xpose.msra.mxu0 0.0
  %909 = vmatprep.subr.mxu0 0.0
  %910 = vmatpush1.xpose.msra.mxu0 0.0
  %911 = vmatprep.subr.mxu0 0.0
  %912 = vmatpush1.xpose.msra.mxu0 0.0
  %913 = vmatprep.subr.mxu0 0.0
  %914 = vmatpush1.xpose.msra.mxu0 0.0
  %915 = vmatprep.subr.mxu0 0.0
  %916 = vmatpush1.xpose.msra.mxu0 0.0
  %917 = vmatprep.subr.mxu0 0.0
  %918 = vmatpush1.xpose.msra.mxu0 0.0
  %919 = vmatprep.subr.mxu0 0.0
  %920 = vmatpush1.xpose.msra.mxu0 0.0
  %921 = vmatprep.subr.mxu0 0.0
  %922 = vmatpush1.xpose.msra.mxu0 0.0
  %923 = vmatprep.subr.mxu0 0.0
  %924 = vmatpush1.xpose.msra.mxu0 0.0
  %925 = vmatprep.subr.mxu0 0.0
  %926 = vmatpush1.xpose.msra.mxu0 0.0
  %927 = vmatprep.subr.mxu0 0.0
  %928 = vmatpush1.xpose.msra.mxu0 0.0
  %929 = vmatprep.subr.mxu0 0.0
  %930 = vmatpush1.xpose.msra.mxu0 0.0
  %931 = vmatprep.subr.mxu0 0.0
  %932 = vmatpush1.xpose.msra.mxu0 0.0
  %933 = vmatprep.subr.mxu0 0.0
  %934 = vmatpush1.xpose.msra.mxu0 0.0
  %935 = vmatprep.subr.mxu0 0.0
  %936 = vmatpush1.xpose.msra.mxu0 0.0
  %937 = vmatprep.subr.mxu0 0.0
  %938 = vmatpush1.xpose.msra.mxu0 0.0
  %939 = vmatprep.subr.mxu0 0.0
  %940 = vmatpush1.xpose.msra.mxu0 0.0
  %941 = vmatprep.subr.mxu0 0.0
  %942 = vmatpush1.xpose.msra.mxu0 0.0
  %943 = vmatprep.subr.mxu0 0.0
  %944 = vmatpush1.xpose.msra.mxu0 0.0
  %945 = vmatprep.subr.mxu0 0.0
  %946 = vmatpush1.xpose.msra.mxu0 0.0
  %947 = vmatprep.subr.mxu0 0.0
  %948 = vmatpush1.xpose.msra.mxu0 0.0
  %949 = vmatprep.subr.mxu0 0.0
  %950 = vmatpush1.xpose.msra.mxu0 0.0
  %951 = vmatprep.subr.mxu0 0.0
  %952 = vmatpush1.xpose.msra.mxu0 0.0
  %953 = vmatprep.subr.mxu0 0.0
  %954 = vmatpush1.xpose.msra.mxu0 0.0
  %955 = vmatprep.subr.mxu0 0.0
  %956 = vmatpush1.xpose.msra.mxu0 0.0
  %957 = vmatprep.subr.mxu0 0.0
  %958 = vmatpush1.xpose.msra.mxu0 0.0
  %959 = vmatprep.subr.mxu0 0.0
  %960 = vmatpush1.xpose.msra.mxu0 0.0
  %961 = vmatprep.subr.mxu0 0.0
  %962 = vmatpush1.xpose.msra.mxu0 0.0
  %963 = vmatprep.mubr.f32.mxu0 0.0
  %964 = vmatmul.mubr.f32.gmra.mrb[0].mxu0 %v894
  %v965 = vpop.f32.mrb[0].mxu0
  %v966 = vadd.f32 0.0, %v965
  %v967 = vpop.f32.mrb[0].mxu0
  %968 = vdwg.mxu0
  %v970 = vsel %vm184, %v891, 0
  %972 = vmatprep.subr.mxu0 0.0
  %973 = vmatpush1.xpose.msra.mxu0 %v897
  %974 = vmatprep.subr.mxu0 0.0
  %975 = vmatpush1.xpose.msra.mxu0 0.0
  %976 = vmatprep.subr.mxu0 0.0
  %977 = vmatpush1.xpose.msra.mxu0 0.0
  %978 = vmatprep.subr.mxu0 0.0
  %979 = vmatpush1.xpose.msra.mxu0 0.0
  %980 = vmatprep.subr.mxu0 0.0
  %981 = vmatpush1.xpose.msra.mxu0 0.0
  %982 = vmatprep.subr.mxu0 0.0
  %983 = vmatpush1.xpose.msra.mxu0 0.0
  %984 = vmatprep.subr.mxu0 0.0
  %985 = vmatpush1.xpose.msra.mxu0 0.0
  %986 = vmatprep.subr.mxu0 0.0
  %987 = vmatpush1.xpose.msra.mxu0 0.0
  %988 = vmatprep.subr.mxu0 0.0
  %989 = vmatpush1.xpose.msra.mxu0 0.0
  %990 = vmatprep.subr.mxu0 0.0
  %991 = vmatpush1.xpose.msra.mxu0 0.0
  %992 = vmatprep.subr.mxu0 0.0
  %993 = vmatpush1.xpose.msra.mxu0 0.0
  %994 = vmatprep.subr.mxu0 0.0
  %995 = vmatpush1.xpose.msra.mxu0 0.0
  %996 = vmatprep.subr.mxu0 0.0
  %997 = vmatpush1.xpose.msra.mxu0 0.0
  %998 = vmatprep.subr.mxu0 0.0
  %999 = vmatpush1.xpose.msra.mxu0 0.0
  %1000 = vmatprep.subr.mxu0 0.0
  %1001 = vmatpush1.xpose.msra.mxu0 0.0
  %1002 = vmatprep.subr.mxu0 0.0
  %1003 = vmatpush1.xpose.msra.mxu0 0.0
  %1004 = vmatprep.subr.mxu0 0.0
  %1005 = vmatpush1.xpose.msra.mxu0 0.0
  %1006 = vmatprep.subr.mxu0 0.0
  %1007 = vmatpush1.xpose.msra.mxu0 0.0
  %1008 = vmatprep.subr.mxu0 0.0
  %1009 = vmatpush1.xpose.msra.mxu0 0.0
  %1010 = vmatprep.subr.mxu0 0.0
  %1011 = vmatpush1.xpose.msra.mxu0 0.0
  %1012 = vmatprep.subr.mxu0 0.0
  %1013 = vmatpush1.xpose.msra.mxu0 0.0
  %1014 = vmatprep.subr.mxu0 0.0
  %1015 = vmatpush1.xpose.msra.mxu0 0.0
  %1016 = vmatprep.subr.mxu0 0.0
  %1017 = vmatpush1.xpose.msra.mxu0 0.0
  %1018 = vmatprep.subr.mxu0 0.0
  %1019 = vmatpush1.xpose.msra.mxu0 0.0
  %1020 = vmatprep.subr.mxu0 0.0
  %1021 = vmatpush1.xpose.msra.mxu0 0.0
  %1022 = vmatprep.subr.mxu0 0.0
  %1023 = vmatpush1.xpose.msra.mxu0 0.0
  %1024 = vmatprep.subr.mxu0 0.0
  %1025 = vmatpush1.xpose.msra.mxu0 0.0
  %1026 = vmatprep.subr.mxu0 0.0
  %1027 = vmatpush1.xpose.msra.mxu0 0.0
  %1028 = vmatprep.subr.mxu0 0.0
  %1029 = vmatpush1.xpose.msra.mxu0 0.0
  %1030 = vmatprep.subr.mxu0 0.0
  %1031 = vmatpush1.xpose.msra.mxu0 0.0
  %1032 = vmatprep.subr.mxu0 0.0
  %1033 = vmatpush1.xpose.msra.mxu0 0.0
  %1034 = vmatprep.subr.mxu0 0.0
  %1035 = vmatpush1.xpose.msra.mxu0 0.0
  %1036 = vmatprep.mubr.f32.mxu0 0.0
  %1037 = vmatmul.mubr.f32.gmra.mrb[0].mxu0 %v970
  %v1038 = vpop.f32.mrb[0].mxu0
  %v1039 = vadd.f32 0.0, %v1038
  %v1040 = vpop.f32.mrb[0].mxu0
  %1041 = vdwg.mxu0
  %v1042 = vadd.f32 %v721, %v966
  %v1043 = vadd.f32 %v722, %v1039
  %v1044 = vld [vmem:[%s1 + $0xb8] sm:$0x1]
  %v1045 = vlaneseq
  %v1046 = vshrl.u32 %v1045, 7
  %v1047 = vsub.s32 0, %v1046
  %v1048 = vrot.slane %v1044, %v1047
  %v1049 = vadd.f32 %v1042, %v1048
  %v1050 = vadd.f32 %v1043, %v1048
  %v1051 = vld [vmem:[%s1 + $0xc0] sm:$0xff]
  %v1052 = vld [vmem:[%s1 + $0xc8] sm:$0xff]
  %v1053 = vld [vmem:[%s1 + $0xd0] sm:$0xff]
  %v1054 = vld [vmem:[%s1 + $0xd8] sm:$0xff]
  %v1055 = vld [vmem:[%s1 + $0xe0] sm:$0xff]
  %v1056 = vld [vmem:[%s1 + $0xe8] sm:$0xff]
  %v1057 = vld [vmem:[%s1 + $0xf0] sm:$0xff]
  %v1058 = vld [vmem:[%s1 + $0xf8] sm:$0xff]
  %1060 = vset.pattern.permute.xlu0 0
  %1061 = vperm.xlu0 %1060, %v1055
  %v1062 = vpop.permute.xlu0 %1061
  %1065 = vset.pattern.permute.xlu0 0
  %1066 = vperm.xlu0 %1065, %v1056
  %v1067 = vpop.permute.xlu0 %1066
  %1070 = vset.pattern.permute.xlu0 0
  %1071 = vperm.xlu0 %1070, %v1057
  %v1072 = vpop.permute.xlu0 %1071
  %1075 = vset.pattern.permute.xlu0 0
  %1076 = vperm.xlu0 %1075, %v1058
  %v1077 = vpop.permute.xlu0 %1076
  %v1080 = vsel %vm371, %v1051, 0
  %v1083 = vsel %vm371, %v1052, 0
  %v1086 = vsel %vm371, %v1053, 0
  %v1089 = vsel %vm371, %v1054, 0
  %v1092 = vsel %vm384, %v1049, 0
  %1094 = vmatprep.subr.mxu0 0.0
  %1095 = vmatpush1.msra.mxu0 %v1092
  %1096 = vmatprep.subr.mxu0 0.0
  %1097 = vmatpush1.msra.mxu0 0.0
  %1098 = vmatprep.subr.mxu0 0.0
  %1099 = vmatpush1.msra.mxu0 0.0
  %1100 = vmatprep.subr.mxu0 0.0
  %1101 = vmatpush1.msra.mxu0 0.0
  %1102 = vmatprep.subr.mxu0 0.0
  %1103 = vmatpush1.msra.mxu0 0.0
  %1104 = vmatprep.subr.mxu0 0.0
  %1105 = vmatpush1.msra.mxu0 0.0
  %1106 = vmatprep.subr.mxu0 0.0
  %1107 = vmatpush1.msra.mxu0 0.0
  %1108 = vmatprep.subr.mxu0 0.0
  %1109 = vmatpush1.msra.mxu0 0.0
  %1110 = vmatprep.subr.mxu0 0.0
  %1111 = vmatpush1.msra.mxu0 0.0
  %1112 = vmatprep.subr.mxu0 0.0
  %1113 = vmatpush1.msra.mxu0 0.0
  %1114 = vmatprep.subr.mxu0 0.0
  %1115 = vmatpush1.msra.mxu0 0.0
  %1116 = vmatprep.subr.mxu0 0.0
  %1117 = vmatpush1.msra.mxu0 0.0
  %1118 = vmatprep.subr.mxu0 0.0
  %1119 = vmatpush1.msra.mxu0 0.0
  %1120 = vmatprep.subr.mxu0 0.0
  %1121 = vmatpush1.msra.mxu0 0.0
  %1122 = vmatprep.subr.mxu0 0.0
  %1123 = vmatpush1.msra.mxu0 0.0
  %1124 = vmatprep.subr.mxu0 0.0
  %1125 = vmatpush1.msra.mxu0 0.0
  %1126 = vmatprep.subr.mxu0 0.0
  %1127 = vmatpush1.msra.mxu0 0.0
  %1128 = vmatprep.subr.mxu0 0.0
  %1129 = vmatpush1.msra.mxu0 0.0
  %1130 = vmatprep.subr.mxu0 0.0
  %1131 = vmatpush1.msra.mxu0 0.0
  %1132 = vmatprep.subr.mxu0 0.0
  %1133 = vmatpush1.msra.mxu0 0.0
  %1134 = vmatprep.subr.mxu0 0.0
  %1135 = vmatpush1.msra.mxu0 0.0
  %1136 = vmatprep.subr.mxu0 0.0
  %1137 = vmatpush1.msra.mxu0 0.0
  %1138 = vmatprep.subr.mxu0 0.0
  %1139 = vmatpush1.msra.mxu0 0.0
  %1140 = vmatprep.subr.mxu0 0.0
  %1141 = vmatpush1.msra.mxu0 0.0
  %1142 = vmatprep.subr.mxu0 0.0
  %1143 = vmatpush1.msra.mxu0 0.0
  %1144 = vmatprep.subr.mxu0 0.0
  %1145 = vmatpush1.msra.mxu0 0.0
  %1146 = vmatprep.subr.mxu0 0.0
  %1147 = vmatpush1.msra.mxu0 0.0
  %1148 = vmatprep.subr.mxu0 0.0
  %1149 = vmatpush1.msra.mxu0 0.0
  %1150 = vmatprep.subr.mxu0 0.0
  %1151 = vmatpush1.msra.mxu0 0.0
  %1152 = vmatprep.subr.mxu0 0.0
  %1153 = vmatpush1.msra.mxu0 0.0
  %1154 = vmatprep.subr.mxu0 0.0
  %1155 = vmatpush1.msra.mxu0 0.0
  %1156 = vmatprep.subr.mxu0 0.0
  %1157 = vmatpush1.msra.mxu0 0.0
  %1158 = vmatprep.mubr.f32.mxu0 0.0
  %1159 = vmatmul.mubr.f32.gmra.mrb[0].mxu0 %v1080
  %v1160 = vpop.f32.mrb[0].mxu0
  %v1161 = vadd.f32 %v1062, %v1160
  %v1162 = vpop.f32.mrb[0].mxu0
  %1163 = vmatprep.mubr.f32.mxu0 0.0
  %1164 = vmatmul.mubr.f32.gmra.mrb[0].mxu0 %v1083
  %v1165 = vpop.f32.mrb[0].mxu0
  %v1166 = vadd.f32 %v1067, %v1165
  %v1167 = vpop.f32.mrb[0].mxu0
  %1168 = vmatprep.mubr.f32.mxu0 0.0
  %1169 = vmatmul.mubr.f32.gmra.mrb[0].mxu0 %v1086
  %v1170 = vpop.f32.mrb[0].mxu0
  %v1171 = vadd.f32 %v1072, %v1170
  %v1172 = vpop.f32.mrb[0].mxu0
  %1173 = vmatprep.mubr.f32.mxu0 0.0
  %1174 = vmatmul.mubr.f32.gmra.mrb[0].mxu0 %v1089
  %v1175 = vpop.f32.mrb[0].mxu0
  %v1176 = vadd.f32 %v1077, %v1175
  %v1177 = vpop.f32.mrb[0].mxu0
  %1178 = vdwg.mxu0
  %v1180 = vsel %vm384, %v1050, 0
  %1182 = vmatprep.subr.mxu0 0.0
  %1183 = vmatpush1.msra.mxu0 %v1180
  %1184 = vmatprep.subr.mxu0 0.0
  %1185 = vmatpush1.msra.mxu0 0.0
  %1186 = vmatprep.subr.mxu0 0.0
  %1187 = vmatpush1.msra.mxu0 0.0
  %1188 = vmatprep.subr.mxu0 0.0
  %1189 = vmatpush1.msra.mxu0 0.0
  %1190 = vmatprep.subr.mxu0 0.0
  %1191 = vmatpush1.msra.mxu0 0.0
  %1192 = vmatprep.subr.mxu0 0.0
  %1193 = vmatpush1.msra.mxu0 0.0
  %1194 = vmatprep.subr.mxu0 0.0
  %1195 = vmatpush1.msra.mxu0 0.0
  %1196 = vmatprep.subr.mxu0 0.0
  %1197 = vmatpush1.msra.mxu0 0.0
  %1198 = vmatprep.subr.mxu0 0.0
  %1199 = vmatpush1.msra.mxu0 0.0
  %1200 = vmatprep.subr.mxu0 0.0
  %1201 = vmatpush1.msra.mxu0 0.0
  %1202 = vmatprep.subr.mxu0 0.0
  %1203 = vmatpush1.msra.mxu0 0.0
  %1204 = vmatprep.subr.mxu0 0.0
  %1205 = vmatpush1.msra.mxu0 0.0
  %1206 = vmatprep.subr.mxu0 0.0
  %1207 = vmatpush1.msra.mxu0 0.0
  %1208 = vmatprep.subr.mxu0 0.0
  %1209 = vmatpush1.msra.mxu0 0.0
  %1210 = vmatprep.subr.mxu0 0.0
  %1211 = vmatpush1.msra.mxu0 0.0
  %1212 = vmatprep.subr.mxu0 0.0
  %1213 = vmatpush1.msra.mxu0 0.0
  %1214 = vmatprep.subr.mxu0 0.0
  %1215 = vmatpush1.msra.mxu0 0.0
  %1216 = vmatprep.subr.mxu0 0.0
  %1217 = vmatpush1.msra.mxu0 0.0
  %1218 = vmatprep.subr.mxu0 0.0
  %1219 = vmatpush1.msra.mxu0 0.0
  %1220 = vmatprep.subr.mxu0 0.0
  %1221 = vmatpush1.msra.mxu0 0.0
  %1222 = vmatprep.subr.mxu0 0.0
  %1223 = vmatpush1.msra.mxu0 0.0
  %1224 = vmatprep.subr.mxu0 0.0
  %1225 = vmatpush1.msra.mxu0 0.0
  %1226 = vmatprep.subr.mxu0 0.0
  %1227 = vmatpush1.msra.mxu0 0.0
  %1228 = vmatprep.subr.mxu0 0.0
  %1229 = vmatpush1.msra.mxu0 0.0
  %1230 = vmatprep.subr.mxu0 0.0
  %1231 = vmatpush1.msra.mxu0 0.0
  %1232 = vmatprep.subr.mxu0 0.0
  %1233 = vmatpush1.msra.mxu0 0.0
  %1234 = vmatprep.subr.mxu0 0.0
  %1235 = vmatpush1.msra.mxu0 0.0
  %1236 = vmatprep.subr.mxu0 0.0
  %1237 = vmatpush1.msra.mxu0 0.0
  %1238 = vmatprep.subr.mxu0 0.0
  %1239 = vmatpush1.msra.mxu0 0.0
  %1240 = vmatprep.subr.mxu0 0.0
  %1241 = vmatpush1.msra.mxu0 0.0
  %1242 = vmatprep.subr.mxu0 0.0
  %1243 = vmatpush1.msra.mxu0 0.0
  %1244 = vmatprep.subr.mxu0 0.0
  %1245 = vmatpush1.msra.mxu0 0.0
  %1246 = vmatprep.mubr.f32.mxu0 0.0
  %1247 = vmatmul.mubr.f32.gmra.mrb[0].mxu0 %v1080
  %v1248 = vpop.f32.mrb[0].mxu0
  %v1249 = vadd.f32 %v1062, %v1248
  %v1250 = vpop.f32.mrb[0].mxu0
  %1251 = vmatprep.mubr.f32.mxu0 0.0
  %1252 = vmatmul.mubr.f32.gmra.mrb[0].mxu0 %v1083
  %v1253 = vpop.f32.mrb[0].mxu0
  %v1254 = vadd.f32 %v1067, %v1253
  %v1255 = vpop.f32.mrb[0].mxu0
  %1256 = vmatprep.mubr.f32.mxu0 0.0
  %1257 = vmatmul.mubr.f32.gmra.mrb[0].mxu0 %v1086
  %v1258 = vpop.f32.mrb[0].mxu0
  %v1259 = vadd.f32 %v1072, %v1258
  %v1260 = vpop.f32.mrb[0].mxu0
  %1261 = vmatprep.mubr.f32.mxu0 0.0
  %1262 = vmatmul.mubr.f32.gmra.mrb[0].mxu0 %v1089
  %v1263 = vpop.f32.mrb[0].mxu0
  %v1264 = vadd.f32 %v1077, %v1263
  %v1265 = vpop.f32.mrb[0].mxu0
  %1266 = vdwg.mxu0
  %v1267 = vmax.f32 %v1161, 0.0
  %v1268 = vmax.f32 %v1166, 0.0
  %v1269 = vmax.f32 %v1171, 0.0
  %v1270 = vmax.f32 %v1176, 0.0
  %v1271 = vmax.f32 %v1249, 0.0
  %v1272 = vmax.f32 %v1254, 0.0
  %v1273 = vmax.f32 %v1259, 0.0
  %v1274 = vmax.f32 %v1264, 0.0
  %v1275 = vld [vmem:[%s1 + $0x100] sm:$0xf]
  %v1277 = vsel %vm184, %v1275, 0
  %1279 = vmatprep.subr.mxu0 0.0
  %1280 = vmatpush1.msra.mxu0 %v1267
  %1281 = vmatprep.subr.mxu0 0.0
  %1282 = vmatpush1.msra.mxu0 %v1268
  %1283 = vmatprep.subr.mxu0 0.0
  %1284 = vmatpush1.msra.mxu0 %v1269
  %1285 = vmatprep.subr.mxu0 0.0
  %1286 = vmatpush1.msra.mxu0 %v1270
  %1287 = vmatprep.subr.mxu0 0.0
  %1288 = vmatpush1.msra.mxu0 0.0
  %1289 = vmatprep.subr.mxu0 0.0
  %1290 = vmatpush1.msra.mxu0 0.0
  %1291 = vmatprep.subr.mxu0 0.0
  %1292 = vmatpush1.msra.mxu0 0.0
  %1293 = vmatprep.subr.mxu0 0.0
  %1294 = vmatpush1.msra.mxu0 0.0
  %1295 = vmatprep.subr.mxu0 0.0
  %1296 = vmatpush1.msra.mxu0 0.0
  %1297 = vmatprep.subr.mxu0 0.0
  %1298 = vmatpush1.msra.mxu0 0.0
  %1299 = vmatprep.subr.mxu0 0.0
  %1300 = vmatpush1.msra.mxu0 0.0
  %1301 = vmatprep.subr.mxu0 0.0
  %1302 = vmatpush1.msra.mxu0 0.0
  %1303 = vmatprep.subr.mxu0 0.0
  %1304 = vmatpush1.msra.mxu0 0.0
  %1305 = vmatprep.subr.mxu0 0.0
  %1306 = vmatpush1.msra.mxu0 0.0
  %1307 = vmatprep.subr.mxu0 0.0
  %1308 = vmatpush1.msra.mxu0 0.0
  %1309 = vmatprep.subr.mxu0 0.0
  %1310 = vmatpush1.msra.mxu0 0.0
  %1311 = vmatprep.subr.mxu0 0.0
  %1312 = vmatpush1.msra.mxu0 0.0
  %1313 = vmatprep.subr.mxu0 0.0
  %1314 = vmatpush1.msra.mxu0 0.0
  %1315 = vmatprep.subr.mxu0 0.0
  %1316 = vmatpush1.msra.mxu0 0.0
  %1317 = vmatprep.subr.mxu0 0.0
  %1318 = vmatpush1.msra.mxu0 0.0
  %1319 = vmatprep.subr.mxu0 0.0
  %1320 = vmatpush1.msra.mxu0 0.0
  %1321 = vmatprep.subr.mxu0 0.0
  %1322 = vmatpush1.msra.mxu0 0.0
  %1323 = vmatprep.subr.mxu0 0.0
  %1324 = vmatpush1.msra.mxu0 0.0
  %1325 = vmatprep.subr.mxu0 0.0
  %1326 = vmatpush1.msra.mxu0 0.0
  %1327 = vmatprep.subr.mxu0 0.0
  %1328 = vmatpush1.msra.mxu0 0.0
  %1329 = vmatprep.subr.mxu0 0.0
  %1330 = vmatpush1.msra.mxu0 0.0
  %1331 = vmatprep.subr.mxu0 0.0
  %1332 = vmatpush1.msra.mxu0 0.0
  %1333 = vmatprep.subr.mxu0 0.0
  %1334 = vmatpush1.msra.mxu0 0.0
  %1335 = vmatprep.subr.mxu0 0.0
  %1336 = vmatpush1.msra.mxu0 0.0
  %1337 = vmatprep.subr.mxu0 0.0
  %1338 = vmatpush1.msra.mxu0 0.0
  %1339 = vmatprep.subr.mxu0 0.0
  %1340 = vmatpush1.msra.mxu0 0.0
  %1341 = vmatprep.subr.mxu0 0.0
  %1342 = vmatpush1.msra.mxu0 0.0
  %1343 = vmatprep.mubr.f32.mxu0 0.0
  %1344 = vmatmul.mubr.f32.gmra.mrb[0].mxu0 %v1277
  %v1345 = vpop.f32.mrb[0].mxu0
  %v1346 = vadd.f32 0.0, %v1345
  %v1347 = vpop.f32.mrb[0].mxu0
  %1348 = vdwg.mxu0
  %1349 = vmatprep.subr.mxu0 0.0
  %1350 = vmatpush1.msra.mxu0 %v1271
  %1351 = vmatprep.subr.mxu0 0.0
  %1352 = vmatpush1.msra.mxu0 %v1272
  %1353 = vmatprep.subr.mxu0 0.0
  %1354 = vmatpush1.msra.mxu0 %v1273
  %1355 = vmatprep.subr.mxu0 0.0
  %1356 = vmatpush1.msra.mxu0 %v1274
  %1357 = vmatprep.subr.mxu0 0.0
  %1358 = vmatpush1.msra.mxu0 0.0
  %1359 = vmatprep.subr.mxu0 0.0
  %1360 = vmatpush1.msra.mxu0 0.0
  %1361 = vmatprep.subr.mxu0 0.0
  %1362 = vmatpush1.msra.mxu0 0.0
  %1363 = vmatprep.subr.mxu0 0.0
  %1364 = vmatpush1.msra.mxu0 0.0
  %1365 = vmatprep.subr.mxu0 0.0
  %1366 = vmatpush1.msra.mxu0 0.0
  %1367 = vmatprep.subr.mxu0 0.0
  %1368 = vmatpush1.msra.mxu0 0.0
  %1369 = vmatprep.subr.mxu0 0.0
  %1370 = vmatpush1.msra.mxu0 0.0
  %1371 = vmatprep.subr.mxu0 0.0
  %1372 = vmatpush1.msra.mxu0 0.0
  %1373 = vmatprep.subr.mxu0 0.0
  %1374 = vmatpush1.msra.mxu0 0.0
  %1375 = vmatprep.subr.mxu0 0.0
  %1376 = vmatpush1.msra.mxu0 0.0
  %1377 = vmatprep.subr.mxu0 0.0
  %1378 = vmatpush1.msra.mxu0 0.0
  %1379 = vmatprep.subr.mxu0 0.0
  %1380 = vmatpush1.msra.mxu0 0.0
  %1381 = vmatprep.subr.mxu0 0.0
  %1382 = vmatpush1.msra.mxu0 0.0
  %1383 = vmatprep.subr.mxu0 0.0
  %1384 = vmatpush1.msra.mxu0 0.0
  %1385 = vmatprep.subr.mxu0 0.0
  %1386 = vmatpush1.msra.mxu0 0.0
  %1387 = vmatprep.subr.mxu0 0.0
  %1388 = vmatpush1.msra.mxu0 0.0
  %1389 = vmatprep.subr.mxu0 0.0
  %1390 = vmatpush1.msra.mxu0 0.0
  %1391 = vmatprep.subr.mxu0 0.0
  %1392 = vmatpush1.msra.mxu0 0.0
  %1393 = vmatprep.subr.mxu0 0.0
  %1394 = vmatpush1.msra.mxu0 0.0
  %1395 = vmatprep.subr.mxu0 0.0
  %1396 = vmatpush1.msra.mxu0 0.0
  %1397 = vmatprep.subr.mxu0 0.0
  %1398 = vmatpush1.msra.mxu0 0.0
  %1399 = vmatprep.subr.mxu0 0.0
  %1400 = vmatpush1.msra.mxu0 0.0
  %1401 = vmatprep.subr.mxu0 0.0
  %1402 = vmatpush1.msra.mxu0 0.0
  %1403 = vmatprep.subr.mxu0 0.0
  %1404 = vmatpush1.msra.mxu0 0.0
  %1405 = vmatprep.subr.mxu0 0.0
  %1406 = vmatpush1.msra.mxu0 0.0
  %1407 = vmatprep.subr.mxu0 0.0
  %1408 = vmatpush1.msra.mxu0 0.0
  %1409 = vmatprep.subr.mxu0 0.0
  %1410 = vmatpush1.msra.mxu0 0.0
  %1411 = vmatprep.subr.mxu0 0.0
  %1412 = vmatpush1.msra.mxu0 0.0
  %1413 = vmatprep.mubr.f32.mxu0 0.0
  %1414 = vmatmul.mubr.f32.gmra.mrb[0].mxu0 %v1277
  %v1415 = vpop.f32.mrb[0].mxu0
  %v1416 = vadd.f32 0.0, %v1415
  %v1417 = vpop.f32.mrb[0].mxu0
  %1418 = vdwg.mxu0
  %v1419 = vadd.f32 %v1049, %v1346
  %v1420 = vadd.f32 %v1050, %v1416
  %v1421 = vld [vmem:[%s1 + $0x108] sm:$0xf]
  %1423 = vset.pattern.permute.xlu0 0
  %1424 = vperm.xlu0 %1423, %v1421
  %v1425 = vpop.permute.xlu0 %1424
  %v1427 = vadd.f32 %v1419, %v1425
  %v1428 = vadd.f32 %v1420, %v1425
  %v1429 = vld [vmem:[%s1 + $0x110] sm:$0xff]
  %v1430 = vld [vmem:[%s1 + $0x118] sm:$0x1]
  %v1431 = vlaneseq
  %v1432 = vshrl.u32 %v1431, 7
  %v1433 = vsub.s32 0, %v1432
  %v1434 = vrot.slane %v1430, %v1433
  %v1436 = vsel %vm22, %v1427, 0
  %v1439 = vsel %vm22, %v1429, 0
  %1441 = vmatprep.subr.mxu0 0.0
  %1442 = vmatpush1.xpose.msra.mxu0 %v1439
  %1443 = vmatprep.subr.mxu0 0.0
  %1444 = vmatpush1.xpose.msra.mxu0 0.0
  %1445 = vmatprep.subr.mxu0 0.0
  %1446 = vmatpush1.xpose.msra.mxu0 0.0
  %1447 = vmatprep.subr.mxu0 0.0
  %1448 = vmatpush1.xpose.msra.mxu0 0.0
  %1449 = vmatprep.subr.mxu0 0.0
  %1450 = vmatpush1.xpose.msra.mxu0 0.0
  %1451 = vmatprep.subr.mxu0 0.0
  %1452 = vmatpush1.xpose.msra.mxu0 0.0
  %1453 = vmatprep.subr.mxu0 0.0
  %1454 = vmatpush1.xpose.msra.mxu0 0.0
  %1455 = vmatprep.subr.mxu0 0.0
  %1456 = vmatpush1.xpose.msra.mxu0 0.0
  %1457 = vmatprep.subr.mxu0 0.0
  %1458 = vmatpush1.xpose.msra.mxu0 0.0
  %1459 = vmatprep.subr.mxu0 0.0
  %1460 = vmatpush1.xpose.msra.mxu0 0.0
  %1461 = vmatprep.subr.mxu0 0.0
  %1462 = vmatpush1.xpose.msra.mxu0 0.0
  %1463 = vmatprep.subr.mxu0 0.0
  %1464 = vmatpush1.xpose.msra.mxu0 0.0
  %1465 = vmatprep.subr.mxu0 0.0
  %1466 = vmatpush1.xpose.msra.mxu0 0.0
  %1467 = vmatprep.subr.mxu0 0.0
  %1468 = vmatpush1.xpose.msra.mxu0 0.0
  %1469 = vmatprep.subr.mxu0 0.0
  %1470 = vmatpush1.xpose.msra.mxu0 0.0
  %1471 = vmatprep.subr.mxu0 0.0
  %1472 = vmatpush1.xpose.msra.mxu0 0.0
  %1473 = vmatprep.subr.mxu0 0.0
  %1474 = vmatpush1.xpose.msra.mxu0 0.0
  %1475 = vmatprep.subr.mxu0 0.0
  %1476 = vmatpush1.xpose.msra.mxu0 0.0
  %1477 = vmatprep.subr.mxu0 0.0
  %1478 = vmatpush1.xpose.msra.mxu0 0.0
  %1479 = vmatprep.subr.mxu0 0.0
  %1480 = vmatpush1.xpose.msra.mxu0 0.0
  %1481 = vmatprep.subr.mxu0 0.0
  %1482 = vmatpush1.xpose.msra.mxu0 0.0
  %1483 = vmatprep.subr.mxu0 0.0
  %1484 = vmatpush1.xpose.msra.mxu0 0.0
  %1485 = vmatprep.subr.mxu0 0.0
  %1486 = vmatpush1.xpose.msra.mxu0 0.0
  %1487 = vmatprep.subr.mxu0 0.0
  %1488 = vmatpush1.xpose.msra.mxu0 0.0
  %1489 = vmatprep.subr.mxu0 0.0
  %1490 = vmatpush1.xpose.msra.mxu0 0.0
  %1491 = vmatprep.subr.mxu0 0.0
  %1492 = vmatpush1.xpose.msra.mxu0 0.0
  %1493 = vmatprep.subr.mxu0 0.0
  %1494 = vmatpush1.xpose.msra.mxu0 0.0
  %1495 = vmatprep.subr.mxu0 0.0
  %1496 = vmatpush1.xpose.msra.mxu0 0.0
  %1497 = vmatprep.subr.mxu0 0.0
  %1498 = vmatpush1.xpose.msra.mxu0 0.0
  %1499 = vmatprep.subr.mxu0 0.0
  %1500 = vmatpush1.xpose.msra.mxu0 0.0
  %1501 = vmatprep.subr.mxu0 0.0
  %1502 = vmatpush1.xpose.msra.mxu0 0.0
  %1503 = vmatprep.subr.mxu0 0.0
  %1504 = vmatpush1.xpose.msra.mxu0 0.0
  %1505 = vmatprep.mubr.f32.mxu0 0.0
  %1506 = vmatmul.mubr.f32.gmra.mrb[0].mxu0 %v1436
  %v1507 = vpop.f32.mrb[0].mxu0
  %v1508 = vadd.f32 %v1434, %v1507
  %v1509 = vpop.f32.mrb[0].mxu0
  %1510 = vdwg.mxu0
  %v1512 = vsel %vm22, %v1428, 0
  %1514 = vmatprep.subr.mxu0 0.0
  %1515 = vmatpush1.xpose.msra.mxu0 %v1439
  %1516 = vmatprep.subr.mxu0 0.0
  %1517 = vmatpush1.xpose.msra.mxu0 0.0
  %1518 = vmatprep.subr.mxu0 0.0
  %1519 = vmatpush1.xpose.msra.mxu0 0.0
  %1520 = vmatprep.subr.mxu0 0.0
  %1521 = vmatpush1.xpose.msra.mxu0 0.0
  %1522 = vmatprep.subr.mxu0 0.0
  %1523 = vmatpush1.xpose.msra.mxu0 0.0
  %1524 = vmatprep.subr.mxu0 0.0
  %1525 = vmatpush1.xpose.msra.mxu0 0.0
  %1526 = vmatprep.subr.mxu0 0.0
  %1527 = vmatpush1.xpose.msra.mxu0 0.0
  %1528 = vmatprep.subr.mxu0 0.0
  %1529 = vmatpush1.xpose.msra.mxu0 0.0
  %1530 = vmatprep.subr.mxu0 0.0
  %1531 = vmatpush1.xpose.msra.mxu0 0.0
  %1532 = vmatprep.subr.mxu0 0.0
  %1533 = vmatpush1.xpose.msra.mxu0 0.0
  %1534 = vmatprep.subr.mxu0 0.0
  %1535 = vmatpush1.xpose.msra.mxu0 0.0
  %1536 = vmatprep.subr.mxu0 0.0
  %1537 = vmatpush1.xpose.msra.mxu0 0.0
  %1538 = vmatprep.subr.mxu0 0.0
  %1539 = vmatpush1.xpose.msra.mxu0 0.0
  %1540 = vmatprep.subr.mxu0 0.0
  %1541 = vmatpush1.xpose.msra.mxu0 0.0
  %1542 = vmatprep.subr.mxu0 0.0
  %1543 = vmatpush1.xpose.msra.mxu0 0.0
  %1544 = vmatprep.subr.mxu0 0.0
  %1545 = vmatpush1.xpose.msra.mxu0 0.0
  %1546 = vmatprep.subr.mxu0 0.0
  %1547 = vmatpush1.xpose.msra.mxu0 0.0
  %1548 = vmatprep.subr.mxu0 0.0
  %1549 = vmatpush1.xpose.msra.mxu0 0.0
  %1550 = vmatprep.subr.mxu0 0.0
  %1551 = vmatpush1.xpose.msra.mxu0 0.0
  %1552 = vmatprep.subr.mxu0 0.0
  %1553 = vmatpush1.xpose.msra.mxu0 0.0
  %1554 = vmatprep.subr.mxu0 0.0
  %1555 = vmatpush1.xpose.msra.mxu0 0.0
  %1556 = vmatprep.subr.mxu0 0.0
  %1557 = vmatpush1.xpose.msra.mxu0 0.0
  %1558 = vmatprep.subr.mxu0 0.0
  %1559 = vmatpush1.xpose.msra.mxu0 0.0
  %1560 = vmatprep.subr.mxu0 0.0
  %1561 = vmatpush1.xpose.msra.mxu0 0.0
  %1562 = vmatprep.subr.mxu0 0.0
  %1563 = vmatpush1.xpose.msra.mxu0 0.0
  %1564 = vmatprep.subr.mxu0 0.0
  %1565 = vmatpush1.xpose.msra.mxu0 0.0
  %1566 = vmatprep.subr.mxu0 0.0
  %1567 = vmatpush1.xpose.msra.mxu0 0.0
  %1568 = vmatprep.subr.mxu0 0.0
  %1569 = vmatpush1.xpose.msra.mxu0 0.0
  %1570 = vmatprep.subr.mxu0 0.0
  %1571 = vmatpush1.xpose.msra.mxu0 0.0
  %1572 = vmatprep.subr.mxu0 0.0
  %1573 = vmatpush1.xpose.msra.mxu0 0.0
  %1574 = vmatprep.subr.mxu0 0.0
  %1575 = vmatpush1.xpose.msra.mxu0 0.0
  %1576 = vmatprep.subr.mxu0 0.0
  %1577 = vmatpush1.xpose.msra.mxu0 0.0
  %1578 = vmatprep.mubr.f32.mxu0 0.0
  %1579 = vmatmul.mubr.f32.gmra.mrb[0].mxu0 %v1512
  %v1580 = vpop.f32.mrb[0].mxu0
  %v1581 = vadd.f32 %v1434, %v1580
  %v1582 = vpop.f32.mrb[0].mxu0
  %1583 = vdwg.mxu0
  %vm1584 = vcmask 60416
  %1585 = vst.msk [vmem:[%s2] sm:$0xf] %vm1584, %v1508
  %1586 = vst.msk [vmem:[%s2 + $0x4] sm:$0xf] %vm1584, %v1581
  // Predicated region
  $region10: #{tsmixer_forward.1} parent=0 // pred_check
    _
  $region11: #{tsmixer_forward.1} parent=0 // pred_check_branch
    %1588 = sbr.rel (0) target = $region13
  $region12: #{tsmixer_forward.1} parent=0 // pred_region
    _
  $region13: #{tsmixer_forward.1} parent=0 // pred_fallthru
    _
  // Predicated region
  $region14: #{tsmixer_forward.1} parent=0 // pred_check
    _
  $region15: #{tsmixer_forward.1} parent=0 // pred_check_branch
    %1590 = sbr.rel (0) target = $region17
  $region16: #{tsmixer_forward.1} parent=0 // pred_region
    _
  $region17: #{tsmixer_forward.1} parent=0 // pred_fallthru
    _

</llo_original>
